<compile_context>
chip_gen: v5e
topology: v5e:2x2
jax: 0.10.0
libtpu: 0.0.40
codegen_flags: <defaults>
</compile_context>

<pallas_src>
import numpy as np
import jax
import jax.numpy as jnp
from jax.experimental import pallas as pl
from jax.experimental.pallas import tpu as pltpu


def _pick_block_b(B, T, target_rows=256):
    """Largest batch block whose row count BB*T stays <= target MXU rows while
    keeping a grid of >= 4 (else >= 2) steps for pipelining / v7x megacore."""
    divisors = [d for d in range(1, B + 1) if B % d == 0]
    for min_grid in (4, 2, 1):
        cands = [d for d in divisors if B // d >= min_grid]
        if not cands:
            continue
        fits = [d for d in cands if d * T <= target_rows]
        return max(fits) if fits else min(cands)
    return 1


def _vmem_limit_bytes():
    """Raise the scoped-VMEM cap above the 16/32 MiB defaults, with headroom
    relative to the chip's physical VMEM (64 MiB on v7x, 128 MiB on v5e/v6e)."""
    try:
        cap = int(pltpu.get_tpu_info().vmem_capacity_bytes)
    except Exception:
        cap = 0
    if cap <= 0:
        cap = 64 << 20
    return int(min(max(cap * 3 // 4, 32 << 20), 100 << 20))


def _make_kernel(BB, T, D, N_HEAD, D_K, E):
    NHDK = N_HEAD * D_K
    F = 3 * NHDK
    BT = BB * T
    EPS = 1e-5
    BF16 = jnp.bfloat16

    def layernorm(x, g, b):
        mu = jnp.mean(x, axis=-1, keepdims=True)
        var = jnp.mean((x - mu) ** 2, axis=-1, keepdims=True)
        return (x - mu) * jax.lax.rsqrt(var + EPS) * g + b

    def kernel(x_ref, xm_ref,
               fc1wT_ref, fc2wT_ref, biasE_ref, wqkv_ref,
               woT_ref, w1T_ref, w2T_ref, vecD_ref, b1_ref,
               out_ref):
        # x block, flattened to token rows (collapse-major reshape: cheap)
        x2 = x_ref[...].reshape(BT, D)                     # [BT, D] f32
        xf = x2.astype(BF16)

        # packed small vectors (two DMAs instead of ~10)
        bo, g1, be1 = vecD_ref[0:1, :], vecD_ref[1:2, :], vecD_ref[2:3, :]
        b2, g2, be2 = vecD_ref[3:4, :], vecD_ref[4:5, :], vecD_ref[5:6, :]
        fc1b, fc2b = biasE_ref[0:1, :], biasE_ref[1:2, :]

        # --- TransformAttention gate [BB, E]; mean over x1 is hoisted to wrapper ---
        xm = xm_ref[...].reshape(BB, D)                    # [BB, D] f32
        a1 = jnp.dot(xm.astype(BF16), fc1wT_ref[...],
                     preferred_element_type=jnp.float32) + fc1b
        a1 = jnp.maximum(a1, 0.0)
        a2 = jnp.dot(a1.astype(BF16), fc2wT_ref[...],
                     preferred_element_type=jnp.float32) + fc2b
        gate = 1.0 / (1.0 + jnp.exp(-a2))                  # [BB, E] f32

        # --- fused QKV projection of ALL experts: one lane-dense matmul ---
        # qkv[b,t,:] = sum_e gate[b,e] * (x[b,t,:] @ Wqkv[e]); Q columns already
        # carry the 1/sqrt(d_model) attention scale (folded at host packing).
        proj = jnp.dot(xf, wqkv_ref[...],
                       preferred_element_type=jnp.float32)  # [BT, E*F]
        proj = proj.reshape(BB, T, E * F)
        qkv = proj[:, :, 0:F] * gate[:, 0:1][:, :, None]
        for e in range(1, E):
            qkv = qkv + proj[:, :, e * F:(e + 1) * F] * gate[:, e:e + 1][:, :, None]
        qkv_bf = qkv.astype(BF16)                          # single bf16 cast

        # --- multi-head attention with per-head distributed w_o projection ---
        acc = None
        for h in range(N_HEAD):
            q_h = qkv_bf[:, :, h * D_K:(h + 1) * D_K]                       # pre-scaled
            k_h = qkv_bf[:, :, NHDK + h * D_K:NHDK + (h + 1) * D_K]
            v_h = qkv_bf[:, :, 2 * NHDK + h * D_K:2 * NHDK + (h + 1) * D_K]
            s = jnp.einsum('bqd,bkd->bqk', q_h, k_h,
                           preferred_element_type=jnp.float32)              # [BB, T, T]
            s = s - jnp.max(s, axis=-1, keepdims=True)
            p = jnp.exp(s)
            p = p * pl.reciprocal(jnp.sum(p, axis=-1, keepdims=True), approx=True)
            o_h = jnp.einsum('bqk,bkd->bqd', p.astype(BF16), v_h,
                             preferred_element_type=jnp.float32)            # [BB, T, D_K]
            c_h = jnp.dot(o_h.reshape(BT, D_K).astype(BF16),
                          woT_ref[h * D_K:(h + 1) * D_K, :],
                          preferred_element_type=jnp.float32)               # [BT, D]
            acc = c_h if acc is None else acc + c_h

        mha = acc + bo + x2                                 # output proj bias + residual (q)
        ln1 = layernorm(mha, g1, be1)

        # --- PositionwiseFeedForward (1x1 convs == per-token linears) ---
        h1 = jnp.dot(ln1.astype(BF16), w1T_ref[...],
                     preferred_element_type=jnp.float32) + b1_ref[...]
        h1 = jnp.maximum(h1, 0.0)
        h2 = jnp.dot(h1.astype(BF16), w2T_ref[...],
                     preferred_element_type=jnp.float32) + b2               # [BT, D]
        out = layernorm(h2 + ln1, g2, be2)
        out_ref[...] = out.reshape(BB, T, D)

    return kernel


def encoder_layer_pallas(x0, x1, kp, *, block_b=None):
    """x0: [B, T, D] enc_input[0]; x1: [B, TX, D] enc_input[1]."""
    B, T, D = x0.shape
    E = kp["fc1wT"].shape[1]
    EF = kp["wqkv"].shape[1]
    F = EF // E
    NHDK = F // 3
    D_K = kp["d_k"]
    N_HEAD = NHDK // D_K

    BB = _pick_block_b(B, T) if block_b is None else block_b
    assert B % BB == 0, "batch must be divisible by the batch block"

    # Hoisted TransformAttention reduction: kernel only needs the [B, 1, D] mean,
    # not the full [BB, TX, D] block (VMEM / cross-sublane-reduce saving).
    xm = jnp.mean(x1, axis=1, keepdims=True)                # [B, 1, D]

    kernel = _make_kernel(BB, T, D, N_HEAD, D_K, E)

    weights = [kp["fc1wT"], kp["fc2wT"], kp["biasE"], kp["wqkv"],
               kp["woT"], kp["w1T"], kp["w2T"], kp["vecD"], kp["b1"]]

    def wspec(arr):
        nd = arr.ndim
        return pl.BlockSpec(arr.shape, lambda b, _n=nd: (0,) * _n)

    in_specs = ([pl.BlockSpec((BB, T, D), lambda b: (b, 0, 0)),
                 pl.BlockSpec((BB, 1, D), lambda b: (b, 0, 0))]
                + [wspec(w) for w in weights])

    out = pl.pallas_call(
        kernel,
        out_shape=jax.ShapeDtypeStruct((B, T, D), jnp.float32),
        grid=(B // BB,),
        in_specs=in_specs,
        out_specs=pl.BlockSpec((BB, T, D), lambda b: (b, 0, 0)),
        compiler_params=pltpu.CompilerParams(
            dimension_semantics=("parallel",),
            vmem_limit_bytes=_vmem_limit_bytes()),
    )(x0, xm, *weights)
    return [out, x1]


# ----------------------- plain-JAX reference (mirrors the PyTorch code) -----------------------
def _layernorm(x, g, b, eps=1e-5):
    mu = jnp.mean(x, axis=-1, keepdims=True)
    var = jnp.mean((x - mu) ** 2, axis=-1, keepdims=True)
    return (x - mu) / jnp.sqrt(var + eps) * g + b


def encoder_layer_reference(x0, x1, raw, N_HEAD, D_K, E):
    B, T, D = x0.shape
    NHDK = N_HEAD * D_K
    # TransformAttention
    m = jnp.mean(x1, axis=1)
    a = jnp.maximum(m @ raw["fc1_w"].T + raw["fc1_b"], 0.0)
    a = a @ raw["fc2_w"].T + raw["fc2_b"]
    attention = jax.nn.sigmoid(a)                                  # [B, E]

    def dynamic_transformer(weight, inp):                          # weight: torch Linear weight [E*NHDK, D]
        wt = weight.T                                              # [D, E*NHDK]
        w = wt.reshape(D, E, NHDK).transpose(1, 0, 2).reshape(E, -1)
        w = (attention @ w).reshape(B, D, NHDK)
        return jnp.einsum("btd,bdf->btf", inp, w)

    qs = dynamic_transformer(raw["qs_w"], x0)
    ks = dynamic_transformer(raw["ks_w"], x0)
    vs = dynamic_transformer(raw["vs_w"], x0)

    def reshape1(z):
        return z.reshape(B, T, N_HEAD, D_K).transpose(2, 0, 1, 3).reshape(-1, T, D_K)

    qs, ks, vs = reshape1(qs), reshape1(ks), reshape1(vs)
    attn = jnp.einsum("ntd,nsd->nts", qs, ks) / np.sqrt(D)
    attn = jax.nn.softmax(attn, axis=-1)
    head = jnp.einsum("nts,nsd->ntd", attn, vs)
    head = head.reshape(N_HEAD, B, T, D_K).transpose(1, 2, 0, 3).reshape(B, T, NHDK)
    out = head @ raw["wo_w"].T + raw["wo_b"]
    out = _layernorm(out + x0, raw["ln1_g"], raw["ln1_b"])
    # PositionwiseFeedForward
    h1 = jnp.maximum(jnp.einsum("btd,ed->bte", out, raw["w1"][:, :, 0]) + raw["b1"], 0.0)
    h2 = jnp.einsum("bte,de->btd", h1, raw["w2"][:, :, 0]) + raw["b2"]
    return _layernorm(h2 + out, raw["ln2_g"], raw["ln2_b"])


if __name__ == "__main__":
    B, T, TX = 16, 8, 8
    D, D_INNER = 32, 64
    N_HEAD, D_K, E = 2, 16, 4            # d_k == d_v (required by the PyTorch reshape1)
    NHDK = N_HEAD * D_K
    SCALE = 1.0 / float(np.sqrt(D))      # ScaledDotProductAttention.temper = sqrt(d_model)

    ks_ = jax.random.split(jax.random.PRNGKey(0), 16)

    def rnd(k, shape, fan_in):
        return (jax.random.normal(k, shape, jnp.float32) / np.sqrt(fan_in)).astype(jnp.float32)

    raw = {
        "qs_w": rnd(ks_[0], (E * NHDK, D), D),
        "ks_w": rnd(ks_[1], (E * NHDK, D), D),
        "vs_w": rnd(ks_[2], (E * NHDK, D), D),
        "fc1_w": rnd(ks_[3], (E, D), D),
        "fc1_b": rnd(ks_[4], (E,), D),
        "fc2_w": rnd(ks_[5], (E, E), E),
        "fc2_b": rnd(ks_[6], (E,), E),
        "wo_w": rnd(ks_[7], (D, NHDK), NHDK),
        "wo_b": rnd(ks_[8], (D,), NHDK),
        "ln1_g": jnp.ones((D,), jnp.float32),
        "ln1_b": jnp.zeros((D,), jnp.float32),
        "w1": rnd(ks_[9], (D_INNER, D, 1), D),      # Conv1d(d_model, d_inner, 1).weight
        "b1": rnd(ks_[10], (D_INNER,), D),
        "w2": rnd(ks_[11], (D, D_INNER, 1), D_INNER),
        "b2": rnd(ks_[12], (D,), D_INNER),
        "ln2_g": jnp.ones((D,), jnp.float32),
        "ln2_b": jnp.zeros((D,), jnp.float32),
    }

    # host-side weight plumbing (layout packing + constant scale fold + bf16 cast)
    def to_exp3d(w):   # Linear.weight [E*NHDK, D] -> [E, D, NHDK], matches torch view/permute
        return w.reshape(E, NHDK, D).transpose(0, 2, 1)

    wq = to_exp3d(raw["qs_w"]) * SCALE                 # fold 1/sqrt(d_model) into Q weights
    wk = to_exp3d(raw["ks_w"])
    wv = to_exp3d(raw["vs_w"])
    w_per_e = jnp.concatenate([wq, wk, wv], axis=-1)   # [E, D, 3*NHDK]
    wqkv = jnp.transpose(w_per_e, (1, 0, 2)).reshape(D, E * 3 * NHDK).astype(jnp.bfloat16)

    kp = {
        "d_k": D_K,
        "fc1wT": raw["fc1_w"].T.astype(jnp.bfloat16),                        # [D, E]
        "fc2wT": raw["fc2_w"].T.astype(jnp.bfloat16),                        # [E, E]
        "biasE": jnp.stack([raw["fc1_b"], raw["fc2_b"]], axis=0),            # [2, E]
        "wqkv": wqkv,                                                        # [D, E*3*NHDK]
        "woT": raw["wo_w"].T.astype(jnp.bfloat16),                           # [NHDK, D]
        "w1T": raw["w1"][:, :, 0].T.astype(jnp.bfloat16),                    # [D, D_INNER]
        "w2T": raw["w2"][:, :, 0].T.astype(jnp.bfloat16),                    # [D_INNER, D]
        "vecD": jnp.stack([raw["wo_b"], raw["ln1_g"], raw["ln1_b"],
                           raw["b2"], raw["ln2_g"], raw["ln2_b"]], axis=0),  # [6, D]
        "b1": raw["b1"].reshape(1, D_INNER),                                 # [1, D_INNER]
    }

    enc_in0 = jax.random.normal(ks_[14], (B, T, D), jnp.float32)
    enc_in1 = jax.random.normal(ks_[15], (B, TX, D), jnp.float32)

    out_list = encoder_layer_pallas(enc_in0, enc_in1, kp)
    out = jax.block_until_ready(out_list[0])

    with jax.default_matmul_precision("highest"):
        ref = jax.block_until_ready(
            encoder_layer_reference(enc_in0, enc_in1, raw, N_HEAD, D_K, E))

    # kernel uses bf16 matmul operands (f32 accumulation) + EUP approx reciprocal
    # in the softmax denominator; tolerance sized accordingly
    np.testing.assert_allclose(np.asarray(out), np.asarray(ref), rtol=3e-2, atol=3e-2)

    print("KERNEL_OK")
</pallas_src>

<mosaic_0001>
module attributes {stable_mosaic.version = 11 : i64} {
  func.func @kernel(%arg0: i32, %arg1: memref<4x8x32xf32, #tpu.memory_space<vmem>>, %arg2: memref<4x1x32xf32, #tpu.memory_space<vmem>>, %arg3: memref<32x4xbf16, #tpu.memory_space<vmem>>, %arg4: memref<4x4xbf16, #tpu.memory_space<vmem>>, %arg5: memref<2x4xf32, #tpu.memory_space<vmem>>, %arg6: memref<32x384xbf16, #tpu.memory_space<vmem>>, %arg7: memref<32x32xbf16, #tpu.memory_space<vmem>>, %arg8: memref<32x64xbf16, #tpu.memory_space<vmem>>, %arg9: memref<64x32xbf16, #tpu.memory_space<vmem>>, %arg10: memref<6x32xf32, #tpu.memory_space<vmem>>, %arg11: memref<1x64xf32, #tpu.memory_space<vmem>>, %arg12: memref<4x8x32xf32, #tpu.memory_space<vmem>>) attributes {dimension_semantics = [#tpu.dimension_semantics<parallel>], iteration_bounds = array<i64: 4>, scalar_prefetch = 0 : i64, scratch_operands = 0 : i64, tpu.core_type = #tpu.core_type<tc>, window_params = [{transform_indices = @transform_0, window_bounds = array<i64: 4, 8, 32>}, {transform_indices = @transform_1, window_bounds = array<i64: 4, 1, 32>}, {pipeline_mode = #tpu.pipeline_mode<synchronous>, transform_indices = @transform_2, window_bounds = array<i64: 32, 4>}, {pipeline_mode = #tpu.pipeline_mode<synchronous>, transform_indices = @transform_3, window_bounds = array<i64: 4, 4>}, {pipeline_mode = #tpu.pipeline_mode<synchronous>, transform_indices = @transform_4, window_bounds = array<i64: 2, 4>}, {pipeline_mode = #tpu.pipeline_mode<synchronous>, transform_indices = @transform_5, window_bounds = array<i64: 32, 384>}, {pipeline_mode = #tpu.pipeline_mode<synchronous>, transform_indices = @transform_6, window_bounds = array<i64: 32, 32>}, {pipeline_mode = #tpu.pipeline_mode<synchronous>, transform_indices = @transform_7, window_bounds = array<i64: 32, 64>}, {pipeline_mode = #tpu.pipeline_mode<synchronous>, transform_indices = @transform_8, window_bounds = array<i64: 64, 32>}, {pipeline_mode = #tpu.pipeline_mode<synchronous>, transform_indices = @transform_9, window_bounds = array<i64: 6, 32>}, {pipeline_mode = #tpu.pipeline_mode<synchronous>, transform_indices = @transform_10, window_bounds = array<i64: 1, 64>}, {transform_indices = @transform_11, window_bounds = array<i64: 4, 8, 32>}]} {
    %c0 = arith.constant 0 : index
    %c0_0 = arith.constant 0 : index
    %c0_1 = arith.constant 0 : index
    %0 = vector.load %arg1[%c0, %c0_0, %c0_1] : memref<4x8x32xf32, #tpu.memory_space<vmem>>, vector<4x8x32xf32>
    %1 = vector.shape_cast %0 : vector<4x8x32xf32> to vector<32x32xf32>
    %2 = arith.truncf %1 : vector<32x32xf32> to vector<32x32xbf16>
    %c0_2 = arith.constant 0 : index
    %c0_3 = arith.constant 0 : index
    %3 = vector.load %arg10[%c0_2, %c0_3] : memref<6x32xf32, #tpu.memory_space<vmem>>, vector<1x32xf32>
    %c1 = arith.constant 1 : index
    %c0_4 = arith.constant 0 : index
    %4 = vector.load %arg10[%c1, %c0_4] : memref<6x32xf32, #tpu.memory_space<vmem>>, vector<1x32xf32>
    %c2 = arith.constant 2 : index
    %c0_5 = arith.constant 0 : index
    %5 = vector.load %arg10[%c2, %c0_5] : memref<6x32xf32, #tpu.memory_space<vmem>>, vector<1x32xf32>
    %c3 = arith.constant 3 : index
    %c0_6 = arith.constant 0 : index
    %6 = vector.load %arg10[%c3, %c0_6] : memref<6x32xf32, #tpu.memory_space<vmem>>, vector<1x32xf32>
    %c4 = arith.constant 4 : index
    %c0_7 = arith.constant 0 : index
    %7 = vector.load %arg10[%c4, %c0_7] : memref<6x32xf32, #tpu.memory_space<vmem>>, vector<1x32xf32>
    %c5 = arith.constant 5 : index
    %c0_8 = arith.constant 0 : index
    %8 = vector.load %arg10[%c5, %c0_8] : memref<6x32xf32, #tpu.memory_space<vmem>>, vector<1x32xf32>
    %c0_9 = arith.constant 0 : index
    %c0_10 = arith.constant 0 : index
    %9 = vector.load %arg5[%c0_9, %c0_10] : memref<2x4xf32, #tpu.memory_space<vmem>>, vector<1x4xf32>
    %c1_11 = arith.constant 1 : index
    %c0_12 = arith.constant 0 : index
    %10 = vector.load %arg5[%c1_11, %c0_12] : memref<2x4xf32, #tpu.memory_space<vmem>>, vector<1x4xf32>
    %c0_13 = arith.constant 0 : index
    %c0_14 = arith.constant 0 : index
    %c0_15 = arith.constant 0 : index
    %11 = vector.load %arg2[%c0_13, %c0_14, %c0_15] : memref<4x1x32xf32, #tpu.memory_space<vmem>>, vector<4x1x32xf32>
    %12 = vector.shape_cast %11 : vector<4x1x32xf32> to vector<4x32xf32>
    %13 = arith.truncf %12 : vector<4x32xf32> to vector<4x32xbf16>
    %c0_16 = arith.constant 0 : index
    %c0_17 = arith.constant 0 : index
    %14 = vector.load %arg3[%c0_16, %c0_17] : memref<32x4xbf16, #tpu.memory_space<vmem>>, vector<32x4xbf16>
    %cst = arith.constant dense<0.000000e+00> : vector<4x4xf32>
    %15 = tpu.matmul %13, %14, %cst {dimension_numbers = #tpu.dot_dimension_numbers<[1], [0], [0], [1], [0, 0, 1, 1], [], []>} : vector<4x32xbf16>, vector<32x4xbf16>, vector<4x4xf32> -> vector<4x4xf32>
    %16 = vector.broadcast %9 : vector<1x4xf32> to vector<4x4xf32>
    %17 = arith.addf %15, %16 : vector<4x4xf32>
    %cst_18 = arith.constant 0.000000e+00 : f32
    %18 = vector.broadcast %cst_18 : f32 to vector<4x4xf32>
    %19 = arith.maximumf %17, %18 : vector<4x4xf32>
    %20 = arith.truncf %19 : vector<4x4xf32> to vector<4x4xbf16>
    %c0_19 = arith.constant 0 : index
    %c0_20 = arith.constant 0 : index
    %21 = vector.load %arg4[%c0_19, %c0_20] : memref<4x4xbf16, #tpu.memory_space<vmem>>, vector<4x4xbf16>
    %cst_21 = arith.constant dense<0.000000e+00> : vector<4x4xf32>
    %22 = tpu.matmul %20, %21, %cst_21 {dimension_numbers = #tpu.dot_dimension_numbers<[1], [0], [0], [1], [0, 0, 1, 1], [], []>} : vector<4x4xbf16>, vector<4x4xbf16>, vector<4x4xf32> -> vector<4x4xf32>
    %23 = vector.broadcast %10 : vector<1x4xf32> to vector<4x4xf32>
    %24 = arith.addf %22, %23 : vector<4x4xf32>
    %cst_22 = arith.constant 0.000000e+00 : f32
    %25 = vector.broadcast %cst_22 : f32 to vector<4x4xf32>
    %26 = arith.subf %25, %24 : vector<4x4xf32>
    %27 = math.exp %26 : vector<4x4xf32>
    %cst_23 = arith.constant 1.000000e+00 : f32
    %28 = vector.broadcast %cst_23 : f32 to vector<4x4xf32>
    %29 = arith.addf %28, %27 : vector<4x4xf32>
    %cst_24 = arith.constant 1.000000e+00 : f32
    %30 = vector.broadcast %cst_24 : f32 to vector<4x4xf32>
    %31 = arith.divf %30, %29 : vector<4x4xf32>
    %c0_25 = arith.constant 0 : index
    %c0_26 = arith.constant 0 : index
    %32 = vector.load %arg6[%c0_25, %c0_26] : memref<32x384xbf16, #tpu.memory_space<vmem>>, vector<32x384xbf16>
    %cst_27 = arith.constant dense<0.000000e+00> : vector<32x384xf32>
    %33 = tpu.matmul %2, %32, %cst_27 {dimension_numbers = #tpu.dot_dimension_numbers<[1], [0], [0], [1], [0, 0, 1, 1], [], []>} : vector<32x32xbf16>, vector<32x384xbf16>, vector<32x384xf32> -> vector<32x384xf32>
    %34 = vector.shape_cast %33 : vector<32x384xf32> to vector<4x8x384xf32>
    %35 = vector.extract_strided_slice %34 {offsets = [0, 0, 0], sizes = [4, 8, 96], strides = [1, 1, 1]} : vector<4x8x384xf32> to vector<4x8x96xf32>
    %36 = vector.extract_strided_slice %31 {offsets = [0, 0], sizes = [4, 1], strides = [1, 1]} : vector<4x4xf32> to vector<4x1xf32>
    %37 = vector.shape_cast %36 : vector<4x1xf32> to vector<4x1x1xf32>
    %38 = vector.broadcast %37 : vector<4x1x1xf32> to vector<4x8x96xf32>
    %39 = arith.mulf %35, %38 : vector<4x8x96xf32>
    %40 = vector.extract_strided_slice %34 {offsets = [0, 0, 96], sizes = [4, 8, 96], strides = [1, 1, 1]} : vector<4x8x384xf32> to vector<4x8x96xf32>
    %41 = vector.extract_strided_slice %31 {offsets = [0, 1], sizes = [4, 1], strides = [1, 1]} : vector<4x4xf32> to vector<4x1xf32>
    %42 = vector.shape_cast %41 : vector<4x1xf32> to vector<4x1x1xf32>
    %43 = vector.broadcast %42 : vector<4x1x1xf32> to vector<4x8x96xf32>
    %44 = arith.mulf %40, %43 : vector<4x8x96xf32>
    %45 = arith.addf %39, %44 : vector<4x8x96xf32>
    %46 = vector.extract_strided_slice %34 {offsets = [0, 0, 192], sizes = [4, 8, 96], strides = [1, 1, 1]} : vector<4x8x384xf32> to vector<4x8x96xf32>
    %47 = vector.extract_strided_slice %31 {offsets = [0, 2], sizes = [4, 1], strides = [1, 1]} : vector<4x4xf32> to vector<4x1xf32>
    %48 = vector.shape_cast %47 : vector<4x1xf32> to vector<4x1x1xf32>
    %49 = vector.broadcast %48 : vector<4x1x1xf32> to vector<4x8x96xf32>
    %50 = arith.mulf %46, %49 : vector<4x8x96xf32>
    %51 = arith.addf %45, %50 : vector<4x8x96xf32>
    %52 = vector.extract_strided_slice %34 {offsets = [0, 0, 288], sizes = [4, 8, 96], strides = [1, 1, 1]} : vector<4x8x384xf32> to vector<4x8x96xf32>
    %53 = vector.extract_strided_slice %31 {offsets = [0, 3], sizes = [4, 1], strides = [1, 1]} : vector<4x4xf32> to vector<4x1xf32>
    %54 = vector.shape_cast %53 : vector<4x1xf32> to vector<4x1x1xf32>
    %55 = vector.broadcast %54 : vector<4x1x1xf32> to vector<4x8x96xf32>
    %56 = arith.mulf %52, %55 : vector<4x8x96xf32>
    %57 = arith.addf %51, %56 : vector<4x8x96xf32>
    %58 = arith.truncf %57 : vector<4x8x96xf32> to vector<4x8x96xbf16>
    %59 = vector.extract_strided_slice %58 {offsets = [0, 0, 0], sizes = [4, 8, 16], strides = [1, 1, 1]} : vector<4x8x96xbf16> to vector<4x8x16xbf16>
    %60 = vector.extract_strided_slice %58 {offsets = [0, 0, 32], sizes = [4, 8, 16], strides = [1, 1, 1]} : vector<4x8x96xbf16> to vector<4x8x16xbf16>
    %61 = vector.extract_strided_slice %58 {offsets = [0, 0, 64], sizes = [4, 8, 16], strides = [1, 1, 1]} : vector<4x8x96xbf16> to vector<4x8x16xbf16>
    "tpu.trace_start"() <{level = 10 : i32, message = "bqd,bkd->bqk"}> : () -> ()
    %cst_28 = arith.constant dense<0.000000e+00> : vector<4x8x8xf32>
    %62 = tpu.matmul %59, %60, %cst_28 {dimension_numbers = #tpu.dot_dimension_numbers<[2], [2], [1], [1], [0, 0, 0, 1, 1, 1], [0], [0]>} : vector<4x8x16xbf16>, vector<4x8x16xbf16>, vector<4x8x8xf32> -> vector<4x8x8xf32>
    "tpu.trace_stop"() : () -> ()
    %cst_29 = arith.constant dense<0xFF800000> : vector<4x8xf32>
    %63 = vector.multi_reduction <maximumf>, %62, %cst_29 [2] : vector<4x8x8xf32> to vector<4x8xf32>
    %64 = vector.shape_cast %63 : vector<4x8xf32> to vector<4x8x1xf32>
    %65 = vector.broadcast %64 : vector<4x8x1xf32> to vector<4x8x8xf32>
    %66 = arith.subf %62, %65 : vector<4x8x8xf32>
    %67 = math.exp %66 : vector<4x8x8xf32>
    %cst_30 = arith.constant dense<0.000000e+00> : vector<4x8xf32>
    %68 = vector.multi_reduction <add>, %67, %cst_30 [2] : vector<4x8x8xf32> to vector<4x8xf32>
    %69 = vector.shape_cast %68 : vector<4x8xf32> to vector<4x8x1xf32>
    %70 = tpu.reciprocal %69 {approx = true} : vector<4x8x1xf32> -> vector<4x8x1xf32>
    %71 = vector.broadcast %70 : vector<4x8x1xf32> to vector<4x8x8xf32>
    %72 = arith.mulf %67, %71 : vector<4x8x8xf32>
    %73 = arith.truncf %72 : vector<4x8x8xf32> to vector<4x8x8xbf16>
    "tpu.trace_start"() <{level = 10 : i32, message = "bqk,bkd->bqd"}> : () -> ()
    %cst_31 = arith.constant dense<0.000000e+00> : vector<4x8x16xf32>
    %74 = tpu.matmul %73, %61, %cst_31 {dimension_numbers = #tpu.dot_dimension_numbers<[2], [1], [1], [2], [0, 0, 0, 1, 1, 2], [0], [0]>} : vector<4x8x8xbf16>, vector<4x8x16xbf16>, vector<4x8x16xf32> -> vector<4x8x16xf32>
    "tpu.trace_stop"() : () -> ()
    %75 = vector.shape_cast %74 : vector<4x8x16xf32> to vector<32x16xf32>
    %76 = arith.truncf %75 : vector<32x16xf32> to vector<32x16xbf16>
    %c0_32 = arith.constant 0 : index
    %c0_33 = arith.constant 0 : index
    %77 = vector.load %arg7[%c0_32, %c0_33] : memref<32x32xbf16, #tpu.memory_space<vmem>>, vector<16x32xbf16>
    %cst_34 = arith.constant dense<0.000000e+00> : vector<32x32xf32>
    %78 = tpu.matmul %76, %77, %cst_34 {dimension_numbers = #tpu.dot_dimension_numbers<[1], [0], [0], [1], [0, 0, 1, 1], [], []>} : vector<32x16xbf16>, vector<16x32xbf16>, vector<32x32xf32> -> vector<32x32xf32>
    %79 = vector.extract_strided_slice %58 {offsets = [0, 0, 16], sizes = [4, 8, 16], strides = [1, 1, 1]} : vector<4x8x96xbf16> to vector<4x8x16xbf16>
    %80 = vector.extract_strided_slice %58 {offsets = [0, 0, 48], sizes = [4, 8, 16], strides = [1, 1, 1]} : vector<4x8x96xbf16> to vector<4x8x16xbf16>
    %81 = vector.extract_strided_slice %58 {offsets = [0, 0, 80], sizes = [4, 8, 16], strides = [1, 1, 1]} : vector<4x8x96xbf16> to vector<4x8x16xbf16>
    "tpu.trace_start"() <{level = 10 : i32, message = "bqd,bkd->bqk"}> : () -> ()
    %cst_35 = arith.constant dense<0.000000e+00> : vector<4x8x8xf32>
    %82 = tpu.matmul %79, %80, %cst_35 {dimension_numbers = #tpu.dot_dimension_numbers<[2], [2], [1], [1], [0, 0, 0, 1, 1, 1], [0], [0]>} : vector<4x8x16xbf16>, vector<4x8x16xbf16>, vector<4x8x8xf32> -> vector<4x8x8xf32>
    "tpu.trace_stop"() : () -> ()
    %cst_36 = arith.constant dense<0xFF800000> : vector<4x8xf32>
    %83 = vector.multi_reduction <maximumf>, %82, %cst_36 [2] : vector<4x8x8xf32> to vector<4x8xf32>
    %84 = vector.shape_cast %83 : vector<4x8xf32> to vector<4x8x1xf32>
    %85 = vector.broadcast %84 : vector<4x8x1xf32> to vector<4x8x8xf32>
    %86 = arith.subf %82, %85 : vector<4x8x8xf32>
    %87 = math.exp %86 : vector<4x8x8xf32>
    %cst_37 = arith.constant dense<0.000000e+00> : vector<4x8xf32>
    %88 = vector.multi_reduction <add>, %87, %cst_37 [2] : vector<4x8x8xf32> to vector<4x8xf32>
    %89 = vector.shape_cast %88 : vector<4x8xf32> to vector<4x8x1xf32>
    %90 = tpu.reciprocal %89 {approx = true} : vector<4x8x1xf32> -> vector<4x8x1xf32>
    %91 = vector.broadcast %90 : vector<4x8x1xf32> to vector<4x8x8xf32>
    %92 = arith.mulf %87, %91 : vector<4x8x8xf32>
    %93 = arith.truncf %92 : vector<4x8x8xf32> to vector<4x8x8xbf16>
    "tpu.trace_start"() <{level = 10 : i32, message = "bqk,bkd->bqd"}> : () -> ()
    %cst_38 = arith.constant dense<0.000000e+00> : vector<4x8x16xf32>
    %94 = tpu.matmul %93, %81, %cst_38 {dimension_numbers = #tpu.dot_dimension_numbers<[2], [1], [1], [2], [0, 0, 0, 1, 1, 2], [0], [0]>} : vector<4x8x8xbf16>, vector<4x8x16xbf16>, vector<4x8x16xf32> -> vector<4x8x16xf32>
    "tpu.trace_stop"() : () -> ()
    %95 = vector.shape_cast %94 : vector<4x8x16xf32> to vector<32x16xf32>
    %96 = arith.truncf %95 : vector<32x16xf32> to vector<32x16xbf16>
    %c16 = arith.constant 16 : index
    %c0_39 = arith.constant 0 : index
    %97 = vector.load %arg7[%c16, %c0_39] : memref<32x32xbf16, #tpu.memory_space<vmem>>, vector<16x32xbf16>
    %cst_40 = arith.constant dense<0.000000e+00> : vector<32x32xf32>
    %98 = tpu.matmul %96, %97, %cst_40 {dimension_numbers = #tpu.dot_dimension_numbers<[1], [0], [0], [1], [0, 0, 1, 1], [], []>} : vector<32x16xbf16>, vector<16x32xbf16>, vector<32x32xf32> -> vector<32x32xf32>
    %99 = arith.addf %78, %98 : vector<32x32xf32>
    %100 = vector.broadcast %3 : vector<1x32xf32> to vector<32x32xf32>
    %101 = arith.addf %99, %100 : vector<32x32xf32>
    %102 = arith.addf %101, %1 : vector<32x32xf32>
    %cst_41 = arith.constant dense<0.000000e+00> : vector<32xf32>
    %103 = vector.multi_reduction <add>, %102, %cst_41 [1] : vector<32x32xf32> to vector<32xf32>
    %104 = vector.shape_cast %103 : vector<32xf32> to vector<32x1xf32>
    %cst_42 = arith.constant 3.200000e+01 : f32
    %105 = vector.broadcast %cst_42 : f32 to vector<32x1xf32>
    %106 = arith.divf %104, %105 : vector<32x1xf32>
    %107 = vector.broadcast %106 : vector<32x1xf32> to vector<32x32xf32>
    %108 = arith.subf %102, %107 : vector<32x32xf32>
    %109 = arith.mulf %108, %108 : vector<32x32xf32>
    %cst_43 = arith.constant dense<0.000000e+00> : vector<32xf32>
    %110 = vector.multi_reduction <add>, %109, %cst_43 [1] : vector<32x32xf32> to vector<32xf32>
    %111 = vector.shape_cast %110 : vector<32xf32> to vector<32x1xf32>
    %cst_44 = arith.constant 3.200000e+01 : f32
    %112 = vector.broadcast %cst_44 : f32 to vector<32x1xf32>
    %113 = arith.divf %111, %112 : vector<32x1xf32>
    %114 = vector.broadcast %106 : vector<32x1xf32> to vector<32x32xf32>
    %115 = arith.subf %102, %114 : vector<32x32xf32>
    %cst_45 = arith.constant 9.99999974E-6 : f32
    %116 = vector.broadcast %cst_45 : f32 to vector<32x1xf32>
    %117 = arith.addf %113, %116 : vector<32x1xf32>
    %118 = math.rsqrt %117 : vector<32x1xf32>
    %119 = vector.broadcast %118 : vector<32x1xf32> to vector<32x32xf32>
    %120 = arith.mulf %115, %119 : vector<32x32xf32>
    %121 = vector.broadcast %4 : vector<1x32xf32> to vector<32x32xf32>
    %122 = arith.mulf %120, %121 : vector<32x32xf32>
    %123 = vector.broadcast %5 : vector<1x32xf32> to vector<32x32xf32>
    %124 = arith.addf %122, %123 : vector<32x32xf32>
    %125 = arith.truncf %124 : vector<32x32xf32> to vector<32x32xbf16>
    %c0_46 = arith.constant 0 : index
    %c0_47 = arith.constant 0 : index
    %126 = vector.load %arg8[%c0_46, %c0_47] : memref<32x64xbf16, #tpu.memory_space<vmem>>, vector<32x64xbf16>
    %cst_48 = arith.constant dense<0.000000e+00> : vector<32x64xf32>
    %127 = tpu.matmul %125, %126, %cst_48 {dimension_numbers = #tpu.dot_dimension_numbers<[1], [0], [0], [1], [0, 0, 1, 1], [], []>} : vector<32x32xbf16>, vector<32x64xbf16>, vector<32x64xf32> -> vector<32x64xf32>
    %c0_49 = arith.constant 0 : index
    %c0_50 = arith.constant 0 : index
    %128 = vector.load %arg11[%c0_49, %c0_50] : memref<1x64xf32, #tpu.memory_space<vmem>>, vector<1x64xf32>
    %129 = vector.broadcast %128 : vector<1x64xf32> to vector<32x64xf32>
    %130 = arith.addf %127, %129 : vector<32x64xf32>
    %cst_51 = arith.constant 0.000000e+00 : f32
    %131 = vector.broadcast %cst_51 : f32 to vector<32x64xf32>
    %132 = arith.maximumf %130, %131 : vector<32x64xf32>
    %133 = arith.truncf %132 : vector<32x64xf32> to vector<32x64xbf16>
    %c0_52 = arith.constant 0 : index
    %c0_53 = arith.constant 0 : index
    %134 = vector.load %arg9[%c0_52, %c0_53] : memref<64x32xbf16, #tpu.memory_space<vmem>>, vector<64x32xbf16>
    %cst_54 = arith.constant dense<0.000000e+00> : vector<32x32xf32>
    %135 = tpu.matmul %133, %134, %cst_54 {dimension_numbers = #tpu.dot_dimension_numbers<[1], [0], [0], [1], [0, 0, 1, 1], [], []>} : vector<32x64xbf16>, vector<64x32xbf16>, vector<32x32xf32> -> vector<32x32xf32>
    %136 = vector.broadcast %6 : vector<1x32xf32> to vector<32x32xf32>
    %137 = arith.addf %135, %136 : vector<32x32xf32>
    %138 = arith.addf %137, %124 : vector<32x32xf32>
    %cst_55 = arith.constant dense<0.000000e+00> : vector<32xf32>
    %139 = vector.multi_reduction <add>, %138, %cst_55 [1] : vector<32x32xf32> to vector<32xf32>
    %140 = vector.shape_cast %139 : vector<32xf32> to vector<32x1xf32>
    %cst_56 = arith.constant 3.200000e+01 : f32
    %141 = vector.broadcast %cst_56 : f32 to vector<32x1xf32>
    %142 = arith.divf %140, %141 : vector<32x1xf32>
    %143 = vector.broadcast %142 : vector<32x1xf32> to vector<32x32xf32>
    %144 = arith.subf %138, %143 : vector<32x32xf32>
    %145 = arith.mulf %144, %144 : vector<32x32xf32>
    %cst_57 = arith.constant dense<0.000000e+00> : vector<32xf32>
    %146 = vector.multi_reduction <add>, %145, %cst_57 [1] : vector<32x32xf32> to vector<32xf32>
    %147 = vector.shape_cast %146 : vector<32xf32> to vector<32x1xf32>
    %cst_58 = arith.constant 3.200000e+01 : f32
    %148 = vector.broadcast %cst_58 : f32 to vector<32x1xf32>
    %149 = arith.divf %147, %148 : vector<32x1xf32>
    %150 = vector.broadcast %142 : vector<32x1xf32> to vector<32x32xf32>
    %151 = arith.subf %138, %150 : vector<32x32xf32>
    %cst_59 = arith.constant 9.99999974E-6 : f32
    %152 = vector.broadcast %cst_59 : f32 to vector<32x1xf32>
    %153 = arith.addf %149, %152 : vector<32x1xf32>
    %154 = math.rsqrt %153 : vector<32x1xf32>
    %155 = vector.broadcast %154 : vector<32x1xf32> to vector<32x32xf32>
    %156 = arith.mulf %151, %155 : vector<32x32xf32>
    %157 = vector.broadcast %7 : vector<1x32xf32> to vector<32x32xf32>
    %158 = arith.mulf %156, %157 : vector<32x32xf32>
    %159 = vector.broadcast %8 : vector<1x32xf32> to vector<32x32xf32>
    %160 = arith.addf %158, %159 : vector<32x32xf32>
    %161 = vector.shape_cast %160 : vector<32x32xf32> to vector<4x8x32xf32>
    %c0_60 = arith.constant 0 : index
    %c0_61 = arith.constant 0 : index
    %c0_62 = arith.constant 0 : index
    %162 = vector.load %arg12[%c0_60, %c0_61, %c0_62] : memref<4x8x32xf32, #tpu.memory_space<vmem>>, vector<4x8x32xf32>
    tpu.vector_store %arg12[%c0_60, %c0_61, %c0_62], %161 {strides = array<i32>} : memref<4x8x32xf32, #tpu.memory_space<vmem>>, vector<4x8x32xf32>,
    return
  }
  func.func @transform_0(%arg0: i32) -> (i32, i32, i32) {
    %c0_i32 = arith.constant 0 : i32
    %c0_i32_0 = arith.constant 0 : i32
    %c0_i32_1 = arith.constant 0 : i32
    return %arg0, %c0_i32, %c0_i32_0 : i32, i32, i32
  }
  func.func @transform_1(%arg0: i32) -> (i32, i32, i32) {
    %c0_i32 = arith.constant 0 : i32
    %c0_i32_0 = arith.constant 0 : i32
    %c0_i32_1 = arith.constant 0 : i32
    return %arg0, %c0_i32, %c0_i32_0 : i32, i32, i32
  }
  func.func @transform_2(%arg0: i32) -> (i32, i32) {
    %c0_i32 = arith.constant 0 : i32
    %c0_i32_0 = arith.constant 0 : i32
    %c0_i32_1 = arith.constant 0 : i32
    return %c0_i32, %c0_i32_0 : i32, i32
  }
  func.func @transform_3(%arg0: i32) -> (i32, i32) {
    %c0_i32 = arith.constant 0 : i32
    %c0_i32_0 = arith.constant 0 : i32
    %c0_i32_1 = arith.constant 0 : i32
    return %c0_i32, %c0_i32_0 : i32, i32
  }
  func.func @transform_4(%arg0: i32) -> (i32, i32) {
    %c0_i32 = arith.constant 0 : i32
    %c0_i32_0 = arith.constant 0 : i32
    %c0_i32_1 = arith.constant 0 : i32
    return %c0_i32, %c0_i32_0 : i32, i32
  }
  func.func @transform_5(%arg0: i32) -> (i32, i32) {
    %c0_i32 = arith.constant 0 : i32
    %c0_i32_0 = arith.constant 0 : i32
    %c0_i32_1 = arith.constant 0 : i32
    return %c0_i32, %c0_i32_0 : i32, i32
  }
  func.func @transform_6(%arg0: i32) -> (i32, i32) {
    %c0_i32 = arith.constant 0 : i32
    %c0_i32_0 = arith.constant 0 : i32
    %c0_i32_1 = arith.constant 0 : i32
    return %c0_i32, %c0_i32_0 : i32, i32
  }
  func.func @transform_7(%arg0: i32) -> (i32, i32) {
    %c0_i32 = arith.constant 0 : i32
    %c0_i32_0 = arith.constant 0 : i32
    %c0_i32_1 = arith.constant 0 : i32
    return %c0_i32, %c0_i32_0 : i32, i32
  }
  func.func @transform_8(%arg0: i32) -> (i32, i32) {
    %c0_i32 = arith.constant 0 : i32
    %c0_i32_0 = arith.constant 0 : i32
    %c0_i32_1 = arith.constant 0 : i32
    return %c0_i32, %c0_i32_0 : i32, i32
  }
  func.func @transform_9(%arg0: i32) -> (i32, i32) {
    %c0_i32 = arith.constant 0 : i32
    %c0_i32_0 = arith.constant 0 : i32
    %c0_i32_1 = arith.constant 0 : i32
    return %c0_i32, %c0_i32_0 : i32, i32
  }
  func.func @transform_10(%arg0: i32) -> (i32, i32) {
    %c0_i32 = arith.constant 0 : i32
    %c0_i32_0 = arith.constant 0 : i32
    %c0_i32_1 = arith.constant 0 : i32
    return %c0_i32, %c0_i32_0 : i32, i32
  }
  func.func @transform_11(%arg0: i32) -> (i32, i32, i32) {
    %c0_i32 = arith.constant 0 : i32
    %c0_i32_0 = arith.constant 0 : i32
    %c0_i32_1 = arith.constant 0 : i32
    return %arg0, %c0_i32, %c0_i32_0 : i32, i32, i32
  }
}

</mosaic_0001>

<llo_original>
// kernel: tpu_custom_call.1
$region0: #{tpu_custom_call.1}
  #allocation0 [shape = 'u32[]', space=smem, size = 0x4, offset = 0x4, fixed_abs, tag = 'smem constant byte address 0x4 - core index']
  #allocation1 [shape = 'u32[72,128]{1,0:T(1,128)}', space=vmem, size = 0x9000, scoped, tag = 'internal scratch']
  %s0 = inlined_call_operand.hbm [shape: f32[16,8,32], index: 0, kind: input, shape index: {}]
  %s1 = inlined_call_operand.hbm [shape: f32[16,1,32], index: 1, kind: input, shape index: {}]
  %s2 = inlined_call_operand.vmem [shape: bf16[32,4], index: 2, kind: input, shape index: {}]
  %s3 = inlined_call_operand.hbm [shape: bf16[4,4], index: 3, kind: input, shape index: {}]
  %s4 = inlined_call_operand.hbm [shape: f32[2,4], index: 4, kind: input, shape index: {}]
  %s5 = inlined_call_operand.vmem [shape: bf16[32,384], index: 5, kind: input, shape index: {}]
  %s6 = inlined_call_operand.hbm [shape: bf16[32,32], index: 6, kind: input, shape index: {}]
  %s7 = inlined_call_operand.hbm [shape: bf16[32,64], index: 7, kind: input, shape index: {}]
  %s8 = inlined_call_operand.vmem [shape: bf16[64,32], index: 8, kind: input, shape index: {}]
  %s9 = inlined_call_operand.vmem [shape: f32[6,32], index: 9, kind: input, shape index: {}]
  %s10 = inlined_call_operand.vmem [shape: f32[1,64], index: 10, kind: input, shape index: {}]
  %s11 = inlined_call_operand.hbm [shape: f32[16,8,32], index: 11, kind: output, shape index: {}]
  %s12 = sld [smem:[#allocation0]]
  $region101: #{tpu_custom_call.1} parent=0
    _
  %s14 = ssub.s32 1, %s12
  %s15 = scalar_select 0, %s14, %s12
  $region1: #{tpu_custom_call.1} parent=0
    #allocation2 [shape = 'u8[32768]{0}', space=vmem, size = 0x8000, scoped, tag = 'input window, operand 0']
    #allocation3 [shape = 's32[2]{0}', space=sflag, size = 0x8, scoped, tag = 'scoped memory for tpu_custom_call.1']
    #allocation4 [shape = 's32[2]{0}', space=sflag, size = 0x8, scoped, tag = 'scoped memory for tpu_custom_call.1']
    #allocation5 [shape = 'u8[4096]{0}', space=vmem, size = 0x1000, scoped, tag = 'input window, operand 1']
    #allocation6 [shape = 's32[2]{0}', space=sflag, size = 0x8, scoped, tag = 'scoped memory for tpu_custom_call.1']
    #allocation7 [shape = 'u8[1024]{0}', space=vmem, size = 0x400, scoped, tag = 'input window, operand 3, single buffered']
    #allocation8 [shape = 'u8[1024]{0}', space=vmem, size = 0x400, scoped, tag = 'input window, operand 4, single buffered']
    #allocation9 [shape = 's32[1]{0}', space=sflag, size = 0x4, scoped, tag = 'scoped memory for tpu_custom_call.1']
    #allocation10 [shape = 'u8[8192]{0}', space=vmem, size = 0x2000, scoped, tag = 'input window, operand 6, single buffered']
    #allocation11 [shape = 'u8[8192]{0}', space=vmem, size = 0x2000, scoped, tag = 'input window, operand 7, single buffered']
    #allocation12 [shape = 's32[1]{0}', space=sflag, size = 0x4, scoped, tag = 'scoped memory for tpu_custom_call.1']
    #allocation13 [shape = 'u8[32768]{0}', space=vmem, size = 0x8000, scoped, tag = 'output window, operand 0']
    %16 = vsyncpa [#allocation3], 0
    %s17 = scalar_lea.sflag [#allocation3], 1
    %18 = vsyncpa %s17, 0
    %19 = vsyncpa [#allocation6], 0
    %s20 = scalar_lea.sflag [#allocation6], 1
    %21 = vsyncpa %s20, 0
    %22 = vsyncpa [#allocation9], 0
    %23 = vsyncpa [#allocation12], 0
    %24 = vsyncpa [#allocation4], 0
    %s25 = scalar_lea.sflag [#allocation4], 1
    %26 = vsyncpa %s25, 0
    loop: start=0, step=1, limit=6
    $region2: #{tpu_custom_call.1} parent=1 // loop_pre_header
      _
    $region3: #{tpu_custom_call.1} parent=1 // loop_header
      %s28 = sphi 0, %s32
      %p29 = scmp.ge.s32.totalorder %s28, 6
      %s38 = sphi 0, %s40
      %s41 = sphi 0, %s38
      %s42 = sphi 0, %s41
      %s58 = sphi 0, %s42
      %s64 = sphi 0, %s66
      %s67 = sphi 0, %s64
      %s68 = sphi 0, %s67
      %s84 = sphi 0, %s68
      %s88 = sphi 0, %s88
      %s90 = sphi 0, %s88
      %s91 = sphi 0, %s90
      %s105 = sphi 0, %s91
      %s109 = sphi 0, %s109
      %s111 = sphi 0, %s109
      %s112 = sphi 0, %s111
      %s126 = sphi 0, %s112
      %s130 = sphi 0, %s130
      %s132 = sphi 0, %s130
      %s133 = sphi 0, %s132
      %s147 = sphi 0, %s133
      %s151 = sphi 0, %s151
      %s153 = sphi 0, %s151
      %s154 = sphi 0, %s153
      %s168 = sphi 0, %s154
      %s172 = sphi 0, %s172
      %s174 = sphi 0, %s172
      %s175 = sphi 0, %s174
      %s189 = sphi 0, %s175
      %s193 = sphi 0, %s193
      %s195 = sphi 0, %s193
      %s196 = sphi 0, %s195
      %s210 = sphi 0, %s196
      %s214 = sphi 0, %s214
      %s216 = sphi 0, %s214
      %s217 = sphi 0, %s216
      %s231 = sphi 0, %s217
      %s235 = sphi 0, %s235
      %s237 = sphi 0, %s235
      %s238 = sphi 0, %s237
      %s252 = sphi 0, %s238
      %s256 = sphi 0, %s256
      %s258 = sphi 0, %s256
      %s259 = sphi 0, %s258
      %s273 = sphi 0, %s259
      %s279 = sphi 0, %s281
      %s282 = sphi 0, %s279
      %s283 = sphi 0, %s282
      %s299 = sphi 0, %s283
    $region4: #{tpu_custom_call.1} parent=1 // loop_header_branch
      %31 = sbr.rel (%p29) target = $region8
    $region5: #{tpu_custom_call.1} parent=1 // loop_body
      %s33 = ssub.s32 %s28, 1
      %s34 = ssub.s32 %s28, 2
      %s35 = sadd.s32 %s28, 1
      %s36 = ssub.s32 %s28, %s35
      %p37 = scmp.eq.s32.totalorder %s36, 0
      %s39 = sadd.s32 %s38, 1
      %s40 = scalar_select %p37, %s38, %s39
      %p43 = pneg %p37
      %p44 = scmp.eq.s32.totalorder %s28, 3
      %p45 = por %p43, %p44
      %p46 = scmp.ne.s32.totalorder %s38, %s41
      %p47 = scmp.eq.s32.totalorder %s28, 0
      %p48 = por %p46, %p47
      %p49 = scmp.ne.s32.totalorder %s38, %s41
      %p50 = scmp.eq.s32.totalorder %s33, 3
      %p51 = por %p49, %p50
      %p52 = scmp.ne.s32.totalorder %s41, %s42
      %p53 = scmp.eq.s32.totalorder %s33, 0
      %p54 = por %p52, %p53
      %p55 = scmp.ne.s32.totalorder %s41, %s42
      %p56 = scmp.eq.s32.totalorder %s34, 3
      %p57 = por %p55, %p56
      %p59 = scmp.ne.s32.totalorder %s42, %s58
      %p60 = scmp.eq.s32.totalorder %s34, 0
      %p61 = por %p59, %p60
      %s62 = ssub.s32 %s28, %s35
      %p63 = scmp.eq.s32.totalorder %s62, 0
      %s65 = sadd.s32 %s64, 1
      %s66 = scalar_select %p63, %s64, %s65
      %p69 = pneg %p63
      %p70 = scmp.eq.s32.totalorder %s28, 3
      %p71 = por %p69, %p70
      %p72 = scmp.ne.s32.totalorder %s64, %s67
      %p73 = scmp.eq.s32.totalorder %s28, 0
      %p74 = por %p72, %p73
      %p75 = scmp.ne.s32.totalorder %s64, %s67
      %p76 = scmp.eq.s32.totalorder %s33, 3
      %p77 = por %p75, %p76
      %p78 = scmp.ne.s32.totalorder %s67, %s68
      %p79 = scmp.eq.s32.totalorder %s33, 0
      %p80 = por %p78, %p79
      %p81 = scmp.ne.s32.totalorder %s67, %s68
      %p82 = scmp.eq.s32.totalorder %s34, 3
      %p83 = por %p81, %p82
      %p85 = scmp.ne.s32.totalorder %s68, %s84
      %p86 = scmp.eq.s32.totalorder %s34, 0
      %p87 = por %p85, %p86
      %s89 = sadd.s32 %s88, 1
      %p92 = scmp.eq.s32.totalorder %s28, 3
      %p93 = scmp.ne.s32.totalorder %s88, %s90
      %p94 = scmp.eq.s32.totalorder %s28, 0
      %p95 = por %p93, %p94
      %p96 = scmp.ne.s32.totalorder %s88, %s90
      %p97 = scmp.eq.s32.totalorder %s33, 3
      %p98 = por %p96, %p97
      %p99 = scmp.ne.s32.totalorder %s90, %s91
      %p100 = scmp.eq.s32.totalorder %s33, 0
      %p101 = por %p99, %p100
      %p102 = scmp.ne.s32.totalorder %s90, %s91
      %p103 = scmp.eq.s32.totalorder %s34, 3
      %p104 = por %p102, %p103
      %p106 = scmp.ne.s32.totalorder %s91, %s105
      %p107 = scmp.eq.s32.totalorder %s34, 0
      %p108 = por %p106, %p107
      %s110 = sadd.s32 %s109, 1
      %p113 = scmp.eq.s32.totalorder %s28, 3
      %p114 = scmp.ne.s32.totalorder %s109, %s111
      %p115 = scmp.eq.s32.totalorder %s28, 0
      %p116 = por %p114, %p115
      %p117 = scmp.ne.s32.totalorder %s109, %s111
      %p118 = scmp.eq.s32.totalorder %s33, 3
      %p119 = por %p117, %p118
      %p120 = scmp.ne.s32.totalorder %s111, %s112
      %p121 = scmp.eq.s32.totalorder %s33, 0
      %p122 = por %p120, %p121
      %p123 = scmp.ne.s32.totalorder %s111, %s112
      %p124 = scmp.eq.s32.totalorder %s34, 3
      %p125 = por %p123, %p124
      %p127 = scmp.ne.s32.totalorder %s112, %s126
      %p128 = scmp.eq.s32.totalorder %s34, 0
      %p129 = por %p127, %p128
      %s131 = sadd.s32 %s130, 1
      %p134 = scmp.eq.s32.totalorder %s28, 3
      %p135 = scmp.ne.s32.totalorder %s130, %s132
      %p136 = scmp.eq.s32.totalorder %s28, 0
      %p137 = por %p135, %p136
      %p138 = scmp.ne.s32.totalorder %s130, %s132
      %p139 = scmp.eq.s32.totalorder %s33, 3
      %p140 = por %p138, %p139
      %p141 = scmp.ne.s32.totalorder %s132, %s133
      %p142 = scmp.eq.s32.totalorder %s33, 0
      %p143 = por %p141, %p142
      %p144 = scmp.ne.s32.totalorder %s132, %s133
      %p145 = scmp.eq.s32.totalorder %s34, 3
      %p146 = por %p144, %p145
      %p148 = scmp.ne.s32.totalorder %s133, %s147
      %p149 = scmp.eq.s32.totalorder %s34, 0
      %p150 = por %p148, %p149
      %s152 = sadd.s32 %s151, 1
      %p155 = scmp.eq.s32.totalorder %s28, 3
      %p156 = scmp.ne.s32.totalorder %s151, %s153
      %p157 = scmp.eq.s32.totalorder %s28, 0
      %p158 = por %p156, %p157
      %p159 = scmp.ne.s32.totalorder %s151, %s153
      %p160 = scmp.eq.s32.totalorder %s33, 3
      %p161 = por %p159, %p160
      %p162 = scmp.ne.s32.totalorder %s153, %s154
      %p163 = scmp.eq.s32.totalorder %s33, 0
      %p164 = por %p162, %p163
      %p165 = scmp.ne.s32.totalorder %s153, %s154
      %p166 = scmp.eq.s32.totalorder %s34, 3
      %p167 = por %p165, %p166
      %p169 = scmp.ne.s32.totalorder %s154, %s168
      %p170 = scmp.eq.s32.totalorder %s34, 0
      %p171 = por %p169, %p170
      %s173 = sadd.s32 %s172, 1
      %p176 = scmp.eq.s32.totalorder %s28, 3
      %p177 = scmp.ne.s32.totalorder %s172, %s174
      %p178 = scmp.eq.s32.totalorder %s28, 0
      %p179 = por %p177, %p178
      %p180 = scmp.ne.s32.totalorder %s172, %s174
      %p181 = scmp.eq.s32.totalorder %s33, 3
      %p182 = por %p180, %p181
      %p183 = scmp.ne.s32.totalorder %s174, %s175
      %p184 = scmp.eq.s32.totalorder %s33, 0
      %p185 = por %p183, %p184
      %p186 = scmp.ne.s32.totalorder %s174, %s175
      %p187 = scmp.eq.s32.totalorder %s34, 3
      %p188 = por %p186, %p187
      %p190 = scmp.ne.s32.totalorder %s175, %s189
      %p191 = scmp.eq.s32.totalorder %s34, 0
      %p192 = por %p190, %p191
      %s194 = sadd.s32 %s193, 1
      %p197 = scmp.eq.s32.totalorder %s28, 3
      %p198 = scmp.ne.s32.totalorder %s193, %s195
      %p199 = scmp.eq.s32.totalorder %s28, 0
      %p200 = por %p198, %p199
      %p201 = scmp.ne.s32.totalorder %s193, %s195
      %p202 = scmp.eq.s32.totalorder %s33, 3
      %p203 = por %p201, %p202
      %p204 = scmp.ne.s32.totalorder %s195, %s196
      %p205 = scmp.eq.s32.totalorder %s33, 0
      %p206 = por %p204, %p205
      %p207 = scmp.ne.s32.totalorder %s195, %s196
      %p208 = scmp.eq.s32.totalorder %s34, 3
      %p209 = por %p207, %p208
      %p211 = scmp.ne.s32.totalorder %s196, %s210
      %p212 = scmp.eq.s32.totalorder %s34, 0
      %p213 = por %p211, %p212
      %s215 = sadd.s32 %s214, 1
      %p218 = scmp.eq.s32.totalorder %s28, 3
      %p219 = scmp.ne.s32.totalorder %s214, %s216
      %p220 = scmp.eq.s32.totalorder %s28, 0
      %p221 = por %p219, %p220
      %p222 = scmp.ne.s32.totalorder %s214, %s216
      %p223 = scmp.eq.s32.totalorder %s33, 3
      %p224 = por %p222, %p223
      %p225 = scmp.ne.s32.totalorder %s216, %s217
      %p226 = scmp.eq.s32.totalorder %s33, 0
      %p227 = por %p225, %p226
      %p228 = scmp.ne.s32.totalorder %s216, %s217
      %p229 = scmp.eq.s32.totalorder %s34, 3
      %p230 = por %p228, %p229
      %p232 = scmp.ne.s32.totalorder %s217, %s231
      %p233 = scmp.eq.s32.totalorder %s34, 0
      %p234 = por %p232, %p233
      %s236 = sadd.s32 %s235, 1
      %p239 = scmp.eq.s32.totalorder %s28, 3
      %p240 = scmp.ne.s32.totalorder %s235, %s237
      %p241 = scmp.eq.s32.totalorder %s28, 0
      %p242 = por %p240, %p241
      %p243 = scmp.ne.s32.totalorder %s235, %s237
      %p244 = scmp.eq.s32.totalorder %s33, 3
      %p245 = por %p243, %p244
      %p246 = scmp.ne.s32.totalorder %s237, %s238
      %p247 = scmp.eq.s32.totalorder %s33, 0
      %p248 = por %p246, %p247
      %p249 = scmp.ne.s32.totalorder %s237, %s238
      %p250 = scmp.eq.s32.totalorder %s34, 3
      %p251 = por %p249, %p250
      %p253 = scmp.ne.s32.totalorder %s238, %s252
      %p254 = scmp.eq.s32.totalorder %s34, 0
      %p255 = por %p253, %p254
      %s257 = sadd.s32 %s256, 1
      %p260 = scmp.eq.s32.totalorder %s28, 3
      %p261 = scmp.ne.s32.totalorder %s256, %s258
      %p262 = scmp.eq.s32.totalorder %s28, 0
      %p263 = por %p261, %p262
      %p264 = scmp.ne.s32.totalorder %s256, %s258
      %p265 = scmp.eq.s32.totalorder %s33, 3
      %p266 = por %p264, %p265
      %p267 = scmp.ne.s32.totalorder %s258, %s259
      %p268 = scmp.eq.s32.totalorder %s33, 0
      %p269 = por %p267, %p268
      %p270 = scmp.ne.s32.totalorder %s258, %s259
      %p271 = scmp.eq.s32.totalorder %s34, 3
      %p272 = por %p270, %p271
      %p274 = scmp.ne.s32.totalorder %s259, %s273
      %p275 = scmp.eq.s32.totalorder %s34, 0
      %p276 = por %p274, %p275
      %s277 = ssub.s32 %s28, %s35
      %p278 = scmp.eq.s32.totalorder %s277, 0
      %s280 = sadd.s32 %s279, 1
      %s281 = scalar_select %p278, %s279, %s280
      %p284 = pneg %p278
      %p285 = scmp.eq.s32.totalorder %s28, 3
      %p286 = por %p284, %p285
      %p287 = scmp.ne.s32.totalorder %s279, %s282
      %p288 = scmp.eq.s32.totalorder %s28, 0
      %p289 = por %p287, %p288
      %p290 = scmp.ne.s32.totalorder %s279, %s282
      %p291 = scmp.eq.s32.totalorder %s33, 3
      %p292 = por %p290, %p291
      %p293 = scmp.ne.s32.totalorder %s282, %s283
      %p294 = scmp.eq.s32.totalorder %s33, 0
      %p295 = por %p293, %p294
      %p296 = scmp.ne.s32.totalorder %s282, %s283
      %p297 = scmp.eq.s32.totalorder %s34, 3
      %p298 = por %p296, %p297
      %p300 = scmp.ne.s32.totalorder %s283, %s299
      %p301 = scmp.eq.s32.totalorder %s34, 0
      %p302 = por %p300, %p301
      %p303 = scmp.le.s32.totalorder 1, %s28
      %p304 = scmp.lt.s32.totalorder %s28, 5
      %p305 = pnand %p303, %p304
      %p306 = pneg %p305
      // Predicated region
      $region9: #{tpu_custom_call.1} parent=5 // pred_check
        _
      $region10: #{tpu_custom_call.1} parent=5 // pred_check_branch
        %308 = sbr.rel (%p305) target = $region12
      $region11: #{tpu_custom_call.1} parent=5 // pred_region
        %s309 = ssub.s32 %s28, 1
        // Predicated region
        $region13: #{tpu_custom_call.1} parent=11 // pred_check
          %p310 = pneg %p101
        $region14: #{tpu_custom_call.1} parent=11 // pred_check_branch
          %312 = sbr.rel (%p310) target = $region16
        $region15: #{tpu_custom_call.1} parent=11 // pred_region
          _
        $region16: #{tpu_custom_call.1} parent=11 // pred_fallthru
          _
        // Predicated region
        $region17: #{tpu_custom_call.1} parent=11 // pred_check
          %p313 = pneg %p122
        $region18: #{tpu_custom_call.1} parent=11 // pred_check_branch
          %315 = sbr.rel (%p313) target = $region20
        $region19: #{tpu_custom_call.1} parent=11 // pred_region
          %317 = vsyncadd [#allocation6], 0
          %s319 = sshll.u32 %s3, 4
          %s320 = int_to_ptr.hbm [resolvable:$true] %s319
          %s321 = sshll.u32 [#allocation7], 4
          %s322 = int_to_ptr.vmem [resolvable:$true] %s321
          %324 = dma.hbm_to_vmem [thread:$0]  %s320, 32, %s322, [#allocation6]
        $region20: #{tpu_custom_call.1} parent=11 // pred_fallthru
          _
        // Predicated region
        $region21: #{tpu_custom_call.1} parent=11 // pred_check
          %p325 = pneg %p143
        $region22: #{tpu_custom_call.1} parent=11 // pred_check_branch
          %327 = sbr.rel (%p325) target = $region24
        $region23: #{tpu_custom_call.1} parent=11 // pred_region
          %329 = vsyncadd [#allocation9], 0
          %s331 = sshll.u32 %s4, 4
          %s332 = int_to_ptr.hbm [resolvable:$true] %s331
          %s333 = sshll.u32 [#allocation8], 4
          %s334 = int_to_ptr.vmem [resolvable:$true] %s333
          %336 = dma.hbm_to_vmem [thread:$0]  %s332, 32, %s334, [#allocation9]
        $region24: #{tpu_custom_call.1} parent=11 // pred_fallthru
          _
        // Predicated region
        $region25: #{tpu_custom_call.1} parent=11 // pred_check
          %p337 = pneg %p164
        $region26: #{tpu_custom_call.1} parent=11 // pred_check_branch
          %339 = sbr.rel (%p337) target = $region28
        $region27: #{tpu_custom_call.1} parent=11 // pred_region
          _
        $region28: #{tpu_custom_call.1} parent=11 // pred_fallthru
          _
        // Predicated region
        $region29: #{tpu_custom_call.1} parent=11 // pred_check
          %p340 = pneg %p185
        $region30: #{tpu_custom_call.1} parent=11 // pred_check_branch
          %342 = sbr.rel (%p340) target = $region32
        $region31: #{tpu_custom_call.1} parent=11 // pred_region
          %344 = vsyncadd [#allocation9], 0
          %s345 = sshll.u32 %s6, 4
          %s346 = int_to_ptr.hbm [resolvable:$true] %s345
          %s347 = sshll.u32 [#allocation10], 4
          %s348 = int_to_ptr.vmem [resolvable:$true] %s347
          %353 = dma.hbm_to_vmem [thread:$0]  %s346, 256, %s348, [#allocation9], 64, 64, 4
        $region32: #{tpu_custom_call.1} parent=11 // pred_fallthru
          _
        // Predicated region
        $region33: #{tpu_custom_call.1} parent=11 // pred_check
          %p354 = pneg %p206
        $region34: #{tpu_custom_call.1} parent=11 // pred_check_branch
          %356 = sbr.rel (%p354) target = $region36
        $region35: #{tpu_custom_call.1} parent=11 // pred_region
          %358 = vsyncadd [#allocation12], 0
          %s359 = sshll.u32 %s7, 4
          %s360 = int_to_ptr.hbm [resolvable:$true] %s359
          %s361 = sshll.u32 [#allocation11], 4
          %s362 = int_to_ptr.vmem [resolvable:$true] %s361
          %367 = dma.hbm_to_vmem [thread:$0]  %s360, 256, %s362, [#allocation12], 64, 64, 4
        $region36: #{tpu_custom_call.1} parent=11 // pred_fallthru
          _
        // Predicated region
        $region37: #{tpu_custom_call.1} parent=11 // pred_check
          %p368 = pneg %p227
        $region38: #{tpu_custom_call.1} parent=11 // pred_check_branch
          %370 = sbr.rel (%p368) target = $region40
        $region39: #{tpu_custom_call.1} parent=11 // pred_region
          _
        $region40: #{tpu_custom_call.1} parent=11 // pred_fallthru
          _
        // Predicated region
        $region41: #{tpu_custom_call.1} parent=11 // pred_check
          %p371 = pneg %p248
        $region42: #{tpu_custom_call.1} parent=11 // pred_check_branch
          %373 = sbr.rel (%p371) target = $region44
        $region43: #{tpu_custom_call.1} parent=11 // pred_region
          _
        $region44: #{tpu_custom_call.1} parent=11 // pred_fallthru
          _
        // Predicated region
        $region45: #{tpu_custom_call.1} parent=11 // pred_check
          %p374 = pneg %p269
        $region46: #{tpu_custom_call.1} parent=11 // pred_check_branch
          %376 = sbr.rel (%p374) target = $region48
        $region47: #{tpu_custom_call.1} parent=11 // pred_region
          _
        $region48: #{tpu_custom_call.1} parent=11 // pred_fallthru
          _
      $region12: #{tpu_custom_call.1} parent=5 // pred_fallthru
        _
      %p377 = scmp.lt.s32.totalorder %s28, 4
      // Predicated region
      $region49: #{tpu_custom_call.1} parent=5 // pred_check
        %p378 = pneg %p377
      $region50: #{tpu_custom_call.1} parent=5 // pred_check_branch
        %380 = sbr.rel (%p378) target = $region52
      $region51: #{tpu_custom_call.1} parent=5 // pred_region
        // Predicated region
        $region53: #{tpu_custom_call.1} parent=51 // pred_check
          %p381 = pneg %p48
        $region54: #{tpu_custom_call.1} parent=51 // pred_check_branch
          %383 = sbr.rel (%p381) target = $region56
        $region55: #{tpu_custom_call.1} parent=51 // pred_region
          %s384 = sand.u32 %s38, 1
          %s385 = scalar_lea.sflag [#allocation3], %s384
          %s386 = sand.u32 %s38, 1
          %s387 = smul.addr %s386, 32
          %s388 = scalar_lea.vmem [#allocation2], %s387
          %s389 = smul.u32 4, %s28
          %391 = vsyncadd %s385, 0
          %s392 = smul.addr %s389, 8
          %s393 = scalar_lea.hbm %s0, %s392
          %s394 = sshll.u32 %s393, 4
          %s395 = int_to_ptr.hbm [resolvable:$true] %s394
          %s396 = sshll.u32 %s388, 4
          %s397 = int_to_ptr.vmem [resolvable:$true] %s396
          %402 = dma.hbm_to_vmem [thread:$0]  %s395, 512, %s397, %s385, 128, 128, 8
        $region56: #{tpu_custom_call.1} parent=51 // pred_fallthru
          _
        // Predicated region
        $region57: #{tpu_custom_call.1} parent=51 // pred_check
          %p403 = pneg %p74
        $region58: #{tpu_custom_call.1} parent=51 // pred_check_branch
          %405 = sbr.rel (%p403) target = $region60
        $region59: #{tpu_custom_call.1} parent=51 // pred_region
          %s406 = sand.u32 %s28, 1
          %s407 = scalar_lea.sflag [#allocation6], %s406
          %s408 = sand.u32 %s64, 1
          %s409 = smul.addr %s408, 4
          %s410 = scalar_lea.vmem [#allocation5], %s409
          %s411 = smul.u32 4, %s28
          %413 = vsyncadd %s407, 0
          %s414 = scalar_lea.hbm %s1, %s411
          %s415 = sshll.u32 %s414, 4
          %s416 = int_to_ptr.hbm [resolvable:$true] %s415
          %s417 = sshll.u32 %s410, 4
          %s418 = int_to_ptr.vmem [resolvable:$true] %s417
          %423 = dma.hbm_to_vmem [thread:$0]  %s416, 64, %s418, %s407, 16, 16, 1
        $region60: #{tpu_custom_call.1} parent=51 // pred_fallthru
          _
      $region52: #{tpu_custom_call.1} parent=5 // pred_fallthru
        _
      %p424 = scmp.le.s32.totalorder 1, %s28
      %p425 = scmp.lt.s32.totalorder %s28, 5
      %p426 = pnand %p424, %p425
      %p427 = pneg %p426
      // Predicated region
      $region61: #{tpu_custom_call.1} parent=5 // pred_check
        _
      $region62: #{tpu_custom_call.1} parent=5 // pred_check_branch
        %429 = sbr.rel (%p426) target = $region64
      $region63: #{tpu_custom_call.1} parent=5 // pred_region
        %s430 = ssub.s32 %s28, 1
        %s431 = sand.u32 %s41, 1
        %s432 = scalar_lea.sflag [#allocation3], %s431
        %s433 = sand.u32 %s41, 1
        %s434 = smul.addr %s433, 32
        %s435 = scalar_lea.vmem [#allocation2], %s434
        // Predicated region
        $region65: #{tpu_custom_call.1} parent=63 // pred_check
          %p436 = pneg %p54
        $region66: #{tpu_custom_call.1} parent=63 // pred_check_branch
          %438 = sbr.rel (%p436) target = $region68
        $region67: #{tpu_custom_call.1} parent=63 // pred_region
          %440 = dma.done %s432, 512
        $region68: #{tpu_custom_call.1} parent=63 // pred_fallthru
          _
        %s441 = sand.u32 %s33, 1
        %s442 = scalar_lea.sflag [#allocation6], %s441
        %s443 = sand.u32 %s67, 1
        %s444 = smul.addr %s443, 4
        %s445 = scalar_lea.vmem [#allocation5], %s444
        // Predicated region
        $region69: #{tpu_custom_call.1} parent=63 // pred_check
          %p446 = pneg %p80
        $region70: #{tpu_custom_call.1} parent=63 // pred_check_branch
          %448 = sbr.rel (%p446) target = $region72
        $region71: #{tpu_custom_call.1} parent=63 // pred_region
          %450 = dma.done %s442, 64
        $region72: #{tpu_custom_call.1} parent=63 // pred_fallthru
          _
        // Predicated region
        $region73: #{tpu_custom_call.1} parent=63 // pred_check
          %p451 = pneg %p122
        $region74: #{tpu_custom_call.1} parent=63 // pred_check_branch
          %453 = sbr.rel (%p451) target = $region76
        $region75: #{tpu_custom_call.1} parent=63 // pred_region
          %455 = dma.done [#allocation6], 32
        $region76: #{tpu_custom_call.1} parent=63 // pred_fallthru
          _
        // Predicated region
        $region77: #{tpu_custom_call.1} parent=63 // pred_check
          %p456 = pneg %p143
        $region78: #{tpu_custom_call.1} parent=63 // pred_check_branch
          %458 = sbr.rel (%p456) target = $region80
        $region79: #{tpu_custom_call.1} parent=63 // pred_region
          %460 = dma.done [#allocation9], 32
        $region80: #{tpu_custom_call.1} parent=63 // pred_fallthru
          _
        // Predicated region
        $region81: #{tpu_custom_call.1} parent=63 // pred_check
          %p461 = pneg %p185
        $region82: #{tpu_custom_call.1} parent=63 // pred_check_branch
          %463 = sbr.rel (%p461) target = $region84
        $region83: #{tpu_custom_call.1} parent=63 // pred_region
          %465 = dma.done [#allocation9], 256
        $region84: #{tpu_custom_call.1} parent=63 // pred_fallthru
          _
        // Predicated region
        $region85: #{tpu_custom_call.1} parent=63 // pred_check
          %p466 = pneg %p206
        $region86: #{tpu_custom_call.1} parent=63 // pred_check_branch
          %468 = sbr.rel (%p466) target = $region88
        $region87: #{tpu_custom_call.1} parent=63 // pred_region
          %470 = dma.done [#allocation12], 256
        $region88: #{tpu_custom_call.1} parent=63 // pred_fallthru
          _
        %s471 = sand.u32 %s41, 1
        %s472 = scalar_lea.sflag [#allocation3], %s471
        %s473 = sand.u32 %s41, 1
        %s474 = smul.addr %s473, 32
        %s475 = scalar_lea.vmem [#allocation2], %s474
        %p476 = pneg %p54
        %p477 = pneg %p51
        %s478 = sand.u32 %s33, 1
        %s479 = scalar_lea.sflag [#allocation6], %s478
        %s480 = sand.u32 %s67, 1
        %s481 = smul.addr %s480, 4
        %s482 = scalar_lea.vmem [#allocation5], %s481
        %p483 = pneg %p80
        %p484 = pneg %p77
        %p485 = pneg %p101
        %p486 = pneg %p98
        %p487 = pneg %p122
        %p488 = pneg %p119
        %p489 = pneg %p143
        %p490 = pneg %p140
        %p491 = pneg %p164
        %p492 = pneg %p161
        %p493 = pneg %p185
        %p494 = pneg %p182
        %p495 = pneg %p206
        %p496 = pneg %p203
        %p497 = pneg %p227
        %p498 = pneg %p224
        %p499 = pneg %p248
        %p500 = pneg %p245
        %p501 = pneg %p269
        %p502 = pneg %p266
        %p503 = pneg %p295
        %p504 = pneg %p292
        %s505 = sand.u32 %s282, 1
        %s506 = scalar_lea.sflag [#allocation4], %s505
        %s507 = sand.u32 %s282, 1
        %s508 = smul.addr %s507, 32
        %s509 = scalar_lea.vmem [#allocation13], %s508
        %s510 = smul.u32 4, %s33
        %s511 = smul.u32 4, %s33
        %s512 = smul.u32 4, %s33
        %v514 = vld [vmem:[%s435] sm:$0xff]
        %v515 = vld [vmem:[%s435 + $0x8] sm:$0xff]
        %v516 = vld [vmem:[%s435 + $0x10] sm:$0xff]
        %v517 = vld [vmem:[%s435 + $0x18] sm:$0xff]
        %v518 = vpack.c.bf16 %v515, %v514
        %v519 = vpack.c.bf16 %v517, %v516
        %v520 = vld [vmem:[%s9] sm:$0x1]
        %v521 = vld [vmem:[%s9 + $0x1] sm:$0x1]
        %v522 = vld [vmem:[%s9 + $0x2] sm:$0x1]
        %v523 = vld [vmem:[%s9 + $0x3] sm:$0x1]
        %v524 = vld [vmem:[%s9 + $0x4] sm:$0x1]
        %v525 = vld [vmem:[%s9 + $0x5] sm:$0x1]
        %v526 = vld [vmem:[#allocation8] sm:$0x1]
        %v527 = vld [vmem:[#allocation8 + $0x1] sm:$0x1]
        %v528 = vld [vmem:[%s445] sm:$0x1]
        %v529 = vld [vmem:[%s445 + $0x1] sm:$0x1]
        %v530 = vld [vmem:[%s445 + $0x2] sm:$0x1]
        %v531 = vld [vmem:[%s445 + $0x3] sm:$0x1]
        %v532 = vpack.c.bf16 %v528, %v528
        %v533 = vpack.c.bf16 %v529, %v529
        %v534 = vpack.c.bf16 %v530, %v530
        %v535 = vpack.c.bf16 %v531, %v531
        %v536 = vld [vmem:[%s2] sm:$0xf]
        %v537 = vld [vmem:[%s2 + $0x4] sm:$0xf]
        %v538 = vld [vmem:[%s2 + $0x8] sm:$0xf]
        %v539 = vld [vmem:[%s2 + $0xc] sm:$0xf]
        %v540 = vperm.slane %v526, 0
        %v545 = vunpack.c.l.b16 %v532
        %v546 = vunpack.c.l.b16 %v533
        %v547 = vunpack.c.l.b16 %v534
        %v548 = vunpack.c.l.b16 %v535
        %v549 = vrot.slane %v546, 7
        %vm550 = vcmask 1041409
        %v551 = vsel %vm550, %v549, %v545
        %v552 = vrot.slane %v547, 6
        %vm553 = vcmask 1042434
        %v554 = vsel %vm553, %v552, %v551
        %v555 = vrot.slane %v548, 5
        %vm556 = vcmask 1043459
        %v557 = vsel %vm556, %v555, %v554
        %v558 = vpack.c.b16 %v557, %v557
        %v563 = vunpack.c.l.b16 %v536
        %v564 = vunpack.c.l.b16 %v537
        %v565 = vunpack.c.l.b16 %v538
        %v566 = vunpack.c.l.b16 %v539
        %v567 = vpack.c.b16 %v564, %v563
        %v568 = vpack.c.b16 %v566, %v565
        %vm571 = vcmask 261120
        %v573 = vsel %vm571, %v558, 0
        %575 = vmatpush.bf16.msra.mxu0 0
        %576 = vmatpush.bf16.msra.mxu0 0
        %577 = vmatpush.bf16.msra.mxu0 0
        %578 = vmatpush.bf16.msra.mxu0 0
        %579 = vmatpush.bf16.msra.mxu0 0
        %580 = vmatpush.bf16.msra.mxu0 0
        %581 = vmatpush.bf16.msra.mxu0 %v568
        %582 = vmatpush.bf16.msra.mxu0 %v567
        %583 = vmatmul.bf16.gmra.mxu0 %v573
        %v584 = vpop.f32.mrf.mxu0
        %v585 = vadd.f32 %v540, %v584
        %v586 = vpop.f32.mrf.mxu0
        %587 = vdwg.mxu0
        %v588 = vmax.f32 %v585, 0.0
        %v589 = vpack.c.bf16 %v588, %v588
        %v590 = vld [vmem:[#allocation7] sm:$0x3]
        %v591 = vperm.slane %v527, 0
        %vm592 = vcmask 31744
        %v594 = vsel %vm592, %v589, 0
        %vm596 = vcmask 1041408
        %v598 = vsel %vm596, %v590, 0
        %600 = vmatpush.bf16.msra.mxu0 0
        %601 = vmatpush.bf16.msra.mxu0 0
        %602 = vmatpush.bf16.msra.mxu0 0
        %603 = vmatpush.bf16.msra.mxu0 0
        %604 = vmatpush.bf16.msra.mxu0 0
        %605 = vmatpush.bf16.msra.mxu0 0
        %606 = vmatpush.bf16.msra.mxu0 0
        %607 = vmatpush.bf16.msra.mxu0 %v598
        %608 = vmatmul.bf16.gmra.mxu0 %v594
        %v609 = vpop.f32.mrf.mxu0
        %v610 = vadd.f32 %v591, %v609
        %v611 = vpop.f32.mrf.mxu0
        %612 = vdwg.mxu0
        %v613 = vsub.f32 0.0, %v610
        %v614 = vmul.f32 %v613, 1.442695
        %v615 = vpow.pop %v614
        %v616 = vadd.f32 %v615, 1.0
        %v617 = vrcp.pop %v616
        %v618 = vmul.f32 %v616, %v617
        %v619 = vsub.f32 1.0, %v618
        %v620 = vmul.f32 %v617, %v619
        %v621 = vadd.f32 %v617, %v620
        %vm622 = vweird.f32 %v616
        %vm623 = vweird.f32 %v617
        %vm624 = vmor %vm622, %vm623
        %v625 = vsel %vm624, %v617, %v621
        %v626 = vand.u32 2147483647, %v616
        %vm627 = vcmp.eq.f32.partialorder %v626, 8.507059e+37
        %v628 = vand.u32 %v616, 2147483648
        %v629 = vor.u32 1.1754944e-38, %v628
        %v630 = vsel %vm627, %v629, %v625
        %v631 = vmul.f32 1.0, %v630
        %v632 = vld [vmem:[%s5] sm:$0xff]
        %v633 = vld [vmem:[%s5 + $0x8] sm:$0xf]
        %v634 = vld [vmem:[%s5 + $0xc] sm:$0xff]
        %v635 = vld [vmem:[%s5 + $0x14] sm:$0xf]
        %v636 = vld [vmem:[%s5 + $0x18] sm:$0xff]
        %v637 = vld [vmem:[%s5 + $0x20] sm:$0xf]
        %v638 = vld [vmem:[%s5 + $0x24] sm:$0xff]
        %v639 = vld [vmem:[%s5 + $0x2c] sm:$0xf]
        %v648 = vunpack.c.l.b16 %v632
        %v649 = vunpack.c.h.b16 %v632
        %v650 = vunpack.c.l.b16 %v633
        %v651 = vunpack.c.l.b16 %v634
        %v652 = vunpack.c.h.b16 %v634
        %v653 = vunpack.c.l.b16 %v635
        %v654 = vunpack.c.l.b16 %v636
        %v655 = vunpack.c.h.b16 %v636
        %v656 = vunpack.c.l.b16 %v637
        %v657 = vunpack.c.l.b16 %v638
        %v658 = vunpack.c.h.b16 %v638
        %v659 = vunpack.c.l.b16 %v639
        %v660 = vpack.c.b16 %v651, %v648
        %v661 = vpack.c.b16 %v652, %v649
        %v662 = vpack.c.b16 %v653, %v650
        %v663 = vpack.c.b16 %v657, %v654
        %v664 = vpack.c.b16 %v658, %v655
        %v665 = vpack.c.b16 %v659, %v656
        %v673 = vsel %vm571, %v518, 0
        %v676 = vsel %vm571, %v519, 0
        %678 = vmatpush.bf16.msra.mxu0 0
        %679 = vmatpush.bf16.msra.mxu0 0
        %680 = vmatpush.bf16.msra.mxu0 0
        %681 = vmatpush.bf16.msra.mxu0 0
        %682 = vmatpush.bf16.msra.mxu0 0
        %683 = vmatpush.bf16.msra.mxu0 0
        %684 = vmatpush.bf16.msra.mxu0 %v663
        %685 = vmatpush.bf16.msra.mxu0 %v660
        %686 = vmatmul.bf16.gmra.mxu0 %v673
        %v687 = vpop.f32.mrf.mxu0
        %v688 = vadd.f32 0.0, %v687
        %v689 = vpop.f32.mrf.mxu0
        %v690 = vadd.f32 0.0, %v689
        %691 = vmatmul.bf16.gmra.mxu0 %v676
        %v692 = vpop.f32.mrf.mxu0
        %v693 = vadd.f32 0.0, %v692
        %v694 = vpop.f32.mrf.mxu0
        %v695 = vadd.f32 0.0, %v694
        %696 = vdwg.mxu0
        %697 = vmatpush.bf16.msra.mxu0 0
        %698 = vmatpush.bf16.msra.mxu0 0
        %699 = vmatpush.bf16.msra.mxu0 0
        %700 = vmatpush.bf16.msra.mxu0 0
        %701 = vmatpush.bf16.msra.mxu0 0
        %702 = vmatpush.bf16.msra.mxu0 0
        %703 = vmatpush.bf16.msra.mxu0 %v664
        %704 = vmatpush.bf16.msra.mxu0 %v661
        %705 = vmatmul.bf16.gmra.mxu0 %v673
        %v706 = vpop.f32.mrf.mxu0
        %v707 = vadd.f32 0.0, %v706
        %v708 = vpop.f32.mrf.mxu0
        %v709 = vadd.f32 0.0, %v708
        %710 = vmatmul.bf16.gmra.mxu0 %v676
        %v711 = vpop.f32.mrf.mxu0
        %v712 = vadd.f32 0.0, %v711
        %v713 = vpop.f32.mrf.mxu0
        %v714 = vadd.f32 0.0, %v713
        %715 = vdwg.mxu0
        %716 = vmatpush.bf16.msra.mxu0 0
        %717 = vmatpush.bf16.msra.mxu0 0
        %718 = vmatpush.bf16.msra.mxu0 0
        %719 = vmatpush.bf16.msra.mxu0 0
        %720 = vmatpush.bf16.msra.mxu0 0
        %721 = vmatpush.bf16.msra.mxu0 0
        %722 = vmatpush.bf16.msra.mxu0 %v665
        %723 = vmatpush.bf16.msra.mxu0 %v662
        %724 = vmatmul.bf16.gmra.mxu0 %v673
        %v725 = vpop.f32.mrf.mxu0
        %v726 = vadd.f32 0.0, %v725
        %v727 = vpop.f32.mrf.mxu0
        %v728 = vadd.f32 0.0, %v727
        %729 = vmatmul.bf16.gmra.mxu0 %v676
        %v730 = vpop.f32.mrf.mxu0
        %v731 = vadd.f32 0.0, %v730
        %v732 = vpop.f32.mrf.mxu0
        %v733 = vadd.f32 0.0, %v732
        %734 = vdwg.mxu0
        %v736 = vrot.slane %v631, 1
        %v737 = vrot.slane %v631, 2
        %v738 = vrot.slane %v631, 3
        %v739 = vperm.slane %v631, 0
        %v740 = vperm.slane %v736, 0
        %v741 = vperm.slane %v737, 0
        %v742 = vperm.slane %v738, 0
        %743 = vset.pattern.permute.xlu0 0
        %744 = vperm.xlu0 %743, %v739
        %v745 = vpop.permute.xlu0 %744
        %747 = vset.pattern.permute.xlu0 0
        %748 = vperm.xlu0 %747, %v740
        %v749 = vpop.permute.xlu0 %748
        %751 = vset.pattern.permute.xlu0 0
        %752 = vperm.xlu0 %751, %v741
        %v753 = vpop.permute.xlu0 %752
        %755 = vset.pattern.permute.xlu0 0
        %756 = vperm.xlu0 %755, %v742
        %v757 = vpop.permute.xlu0 %756
        %v759 = vmul.f32 %v688, %v745
        %v760 = vmul.f32 %v690, %v749
        %v761 = vmul.f32 %v693, %v753
        %v762 = vmul.f32 %v695, %v757
        %763 = vset.pattern.permute.xlu0 1
        %764 = vperm.xlu0 %763, %v739
        %v765 = vpop.permute.xlu0 %764
        %767 = vset.pattern.permute.xlu0 1
        %768 = vperm.xlu0 %767, %v740
        %v769 = vpop.permute.xlu0 %768
        %771 = vset.pattern.permute.xlu0 1
        %772 = vperm.xlu0 %771, %v741
        %v773 = vpop.permute.xlu0 %772
        %775 = vset.pattern.permute.xlu0 1
        %776 = vperm.xlu0 %775, %v742
        %v777 = vpop.permute.xlu0 %776
        %v779 = vmul.f32 %v688, %v765
        %v780 = vmul.f32 %v707, %v765
        %v781 = vmul.f32 %v690, %v769
        %v782 = vmul.f32 %v709, %v769
        %v783 = vmul.f32 %v693, %v773
        %v784 = vmul.f32 %v712, %v773
        %v785 = vmul.f32 %v695, %v777
        %v786 = vmul.f32 %v714, %v777
        %795 = vrot.lane.b32.xlu0 %v779, 32
        %v796 = vpop.permute.xlu0 %795
        %797 = vrot.lane.b32.xlu0 %v780, 32
        %v798 = vpop.permute.xlu0 %797
        %799 = vrot.lane.b32.xlu0 %v781, 32
        %v800 = vpop.permute.xlu0 %799
        %801 = vrot.lane.b32.xlu0 %v782, 32
        %v802 = vpop.permute.xlu0 %801
        %803 = vrot.lane.b32.xlu0 %v783, 32
        %v804 = vpop.permute.xlu0 %803
        %805 = vrot.lane.b32.xlu0 %v784, 32
        %v806 = vpop.permute.xlu0 %805
        %807 = vrot.lane.b32.xlu0 %v785, 32
        %v808 = vpop.permute.xlu0 %807
        %809 = vrot.lane.b32.xlu0 %v786, 32
        %v810 = vpop.permute.xlu0 %809
        %v811 = vsel %vm571, %v796, %v798
        %v812 = vsel %vm571, %v800, %v802
        %v813 = vsel %vm571, %v804, %v806
        %v814 = vsel %vm571, %v808, %v810
        %v819 = vadd.f32 %v759, %v811
        %v820 = vadd.f32 %v760, %v812
        %v821 = vadd.f32 %v761, %v813
        %v822 = vadd.f32 %v762, %v814
        %823 = vset.pattern.permute.xlu0 2
        %824 = vperm.xlu0 %823, %v739
        %v825 = vpop.permute.xlu0 %824
        %827 = vset.pattern.permute.xlu0 2
        %828 = vperm.xlu0 %827, %v740
        %v829 = vpop.permute.xlu0 %828
        %831 = vset.pattern.permute.xlu0 2
        %832 = vperm.xlu0 %831, %v741
        %v833 = vpop.permute.xlu0 %832
        %835 = vset.pattern.permute.xlu0 2
        %836 = vperm.xlu0 %835, %v742
        %v837 = vpop.permute.xlu0 %836
        %v839 = vmul.f32 %v707, %v825
        %v840 = vmul.f32 %v726, %v825
        %v841 = vmul.f32 %v709, %v829
        %v842 = vmul.f32 %v728, %v829
        %v843 = vmul.f32 %v712, %v833
        %v844 = vmul.f32 %v731, %v833
        %v845 = vmul.f32 %v714, %v837
        %v846 = vmul.f32 %v733, %v837
        %855 = vrot.lane.b32.xlu0 %v839, 64
        %v856 = vpop.permute.xlu0 %855
        %857 = vrot.lane.b32.xlu0 %v840, 64
        %v858 = vpop.permute.xlu0 %857
        %859 = vrot.lane.b32.xlu0 %v841, 64
        %v860 = vpop.permute.xlu0 %859
        %861 = vrot.lane.b32.xlu0 %v842, 64
        %v862 = vpop.permute.xlu0 %861
        %863 = vrot.lane.b32.xlu0 %v843, 64
        %v864 = vpop.permute.xlu0 %863
        %865 = vrot.lane.b32.xlu0 %v844, 64
        %v866 = vpop.permute.xlu0 %865
        %867 = vrot.lane.b32.xlu0 %v845, 64
        %v868 = vpop.permute.xlu0 %867
        %869 = vrot.lane.b32.xlu0 %v846, 64
        %v870 = vpop.permute.xlu0 %869
        %vm871 = vcmask 523264
        %v872 = vsel %vm871, %v856, %v858
        %v873 = vsel %vm871, %v860, %v862
        %v874 = vsel %vm871, %v864, %v866
        %v875 = vsel %vm871, %v868, %v870
        %v880 = vadd.f32 %v819, %v872
        %v881 = vadd.f32 %v820, %v873
        %v882 = vadd.f32 %v821, %v874
        %v883 = vadd.f32 %v822, %v875
        %884 = vset.pattern.permute.xlu0 3
        %885 = vperm.xlu0 %884, %v739
        %v886 = vpop.permute.xlu0 %885
        %888 = vset.pattern.permute.xlu0 3
        %889 = vperm.xlu0 %888, %v740
        %v890 = vpop.permute.xlu0 %889
        %892 = vset.pattern.permute.xlu0 3
        %893 = vperm.xlu0 %892, %v741
        %v894 = vpop.permute.xlu0 %893
        %896 = vset.pattern.permute.xlu0 3
        %897 = vperm.xlu0 %896, %v742
        %v898 = vpop.permute.xlu0 %897
        %v900 = vmul.f32 %v726, %v886
        %v901 = vmul.f32 %v728, %v890
        %v902 = vmul.f32 %v731, %v894
        %v903 = vmul.f32 %v733, %v898
        %908 = vrot.lane.b32.xlu0 %v900, 96
        %v909 = vpop.permute.xlu0 %908
        %910 = vrot.lane.b32.xlu0 %v901, 96
        %v911 = vpop.permute.xlu0 %910
        %912 = vrot.lane.b32.xlu0 %v902, 96
        %v913 = vpop.permute.xlu0 %912
        %914 = vrot.lane.b32.xlu0 %v903, 96
        %v915 = vpop.permute.xlu0 %914
        %v920 = vadd.f32 %v880, %v909
        %v921 = vadd.f32 %v881, %v911
        %v922 = vadd.f32 %v882, %v913
        %v923 = vadd.f32 %v883, %v915
        %v924 = vpack.c.bf16 %v920, %v920
        %v925 = vpack.c.bf16 %v921, %v921
        %v926 = vpack.c.bf16 %v922, %v922
        %v927 = vpack.c.bf16 %v923, %v923
        %v929 = vunpack.c.l.b16 %v924
        %v930 = vpack.c.b16 %v929, %v929
        %931 = vrot.lane.b32.xlu0 %v930, 96
        %v932 = vpop.permute.xlu0 %931
        %vm933 = vcmask 130048
        %v935 = vsel %vm933, %v924, 0
        %v938 = vsel %vm933, %v932, 0
        %940 = vmatpush.bf16.xpose.msra.mxu0 0
        %941 = vmatpush.bf16.xpose.msra.mxu0 0
        %942 = vmatpush.bf16.xpose.msra.mxu0 0
        %943 = vmatpush.bf16.xpose.msra.mxu0 0
        %944 = vmatpush.bf16.xpose.msra.mxu0 0
        %945 = vmatpush.bf16.xpose.msra.mxu0 0
        %946 = vmatpush.bf16.xpose.msra.mxu0 0
        %947 = vmatpush.bf16.xpose.msra.mxu0 %v938
        %948 = vmatmul.bf16.gmra.mxu0 %v935
        %v949 = vpop.f32.mrf.mxu0
        %v950 = vadd.f32 0.0, %v949
        %v951 = vpop.f32.mrf.mxu0
        %952 = vdwg.mxu0
        %v954 = vunpack.c.l.b16 %v925
        %v955 = vpack.c.b16 %v954, %v954
        %956 = vrot.lane.b32.xlu0 %v955, 96
        %v957 = vpop.permute.xlu0 %956
        %v959 = vsel %vm933, %v925, 0
        %v962 = vsel %vm933, %v957, 0
        %964 = vmatpush.bf16.xpose.msra.mxu0 0
        %965 = vmatpush.bf16.xpose.msra.mxu0 0
        %966 = vmatpush.bf16.xpose.msra.mxu0 0
        %967 = vmatpush.bf16.xpose.msra.mxu0 0
        %968 = vmatpush.bf16.xpose.msra.mxu0 0
        %969 = vmatpush.bf16.xpose.msra.mxu0 0
        %970 = vmatpush.bf16.xpose.msra.mxu0 0
        %971 = vmatpush.bf16.xpose.msra.mxu0 %v962
        %972 = vmatmul.bf16.gmra.mxu0 %v959
        %v973 = vpop.f32.mrf.mxu0
        %v974 = vadd.f32 0.0, %v973
        %v975 = vpop.f32.mrf.mxu0
        %976 = vdwg.mxu0
        %v978 = vunpack.c.l.b16 %v926
        %v979 = vpack.c.b16 %v978, %v978
        %980 = vrot.lane.b32.xlu0 %v979, 96
        %v981 = vpop.permute.xlu0 %980
        %v983 = vsel %vm933, %v926, 0
        %v986 = vsel %vm933, %v981, 0
        %988 = vmatpush.bf16.xpose.msra.mxu0 0
        %989 = vmatpush.bf16.xpose.msra.mxu0 0
        %990 = vmatpush.bf16.xpose.msra.mxu0 0
        %991 = vmatpush.bf16.xpose.msra.mxu0 0
        %992 = vmatpush.bf16.xpose.msra.mxu0 0
        %993 = vmatpush.bf16.xpose.msra.mxu0 0
        %994 = vmatpush.bf16.xpose.msra.mxu0 0
        %995 = vmatpush.bf16.xpose.msra.mxu0 %v986
        %996 = vmatmul.bf16.gmra.mxu0 %v983
        %v997 = vpop.f32.mrf.mxu0
        %v998 = vadd.f32 0.0, %v997
        %v999 = vpop.f32.mrf.mxu0
        %1000 = vdwg.mxu0
        %v1002 = vunpack.c.l.b16 %v927
        %v1003 = vpack.c.b16 %v1002, %v1002
        %1004 = vrot.lane.b32.xlu0 %v1003, 96
        %v1005 = vpop.permute.xlu0 %1004
        %v1007 = vsel %vm933, %v927, 0
        %v1010 = vsel %vm933, %v1005, 0
        %1012 = vmatpush.bf16.xpose.msra.mxu0 0
        %1013 = vmatpush.bf16.xpose.msra.mxu0 0
        %1014 = vmatpush.bf16.xpose.msra.mxu0 0
        %1015 = vmatpush.bf16.xpose.msra.mxu0 0
        %1016 = vmatpush.bf16.xpose.msra.mxu0 0
        %1017 = vmatpush.bf16.xpose.msra.mxu0 0
        %1018 = vmatpush.bf16.xpose.msra.mxu0 0
        %1019 = vmatpush.bf16.xpose.msra.mxu0 %v1010
        %1020 = vmatmul.bf16.gmra.mxu0 %v1007
        %v1021 = vpop.f32.mrf.mxu0
        %v1022 = vadd.f32 0.0, %v1021
        %v1023 = vpop.f32.mrf.mxu0
        %1024 = vdwg.mxu0
        %vm1025 = vcmask 64512
        %v1026 = vsel %vm1025, %v950, -inf
        %1027 = vmax.xlane.f32.xlu0 %v1026
        %v1028 = vpop.xlane.xlu0 %1027
        %v1029 = vsel %vm1025, %v974, -inf
        %1030 = vmax.xlane.f32.xlu0 %v1029
        %v1031 = vpop.xlane.xlu0 %1030
        %v1032 = vsel %vm1025, %v998, -inf
        %1033 = vmax.xlane.f32.xlu0 %v1032
        %v1034 = vpop.xlane.xlu0 %1033
        %v1035 = vsel %vm1025, %v1022, -inf
        %1036 = vmax.xlane.f32.xlu0 %v1035
        %v1037 = vpop.xlane.xlu0 %1036
        %v1038 = vsub.f32 %v950, %v1028
        %v1039 = vsub.f32 %v974, %v1031
        %v1040 = vsub.f32 %v998, %v1034
        %v1041 = vsub.f32 %v1022, %v1037
        %v1042 = vmul.f32 %v1038, 1.442695
        %v1043 = vpow.pop %v1042
        %v1044 = vmul.f32 %v1039, 1.442695
        %v1045 = vpow.pop %v1044
        %v1046 = vmul.f32 %v1040, 1.442695
        %v1047 = vpow.pop %v1046
        %v1048 = vmul.f32 %v1041, 1.442695
        %v1049 = vpow.pop %v1048
        %v1050 = vsel %vm1025, %v1043, 0.0
        %1051 = vadd.xlane.f32.xlu0 %v1050
        %v1052 = vpop.xlane.xlu0 %1051
        %v1053 = vsel %vm1025, %v1045, 0.0
        %1054 = vadd.xlane.f32.xlu0 %v1053
        %v1055 = vpop.xlane.xlu0 %1054
        %v1056 = vsel %vm1025, %v1047, 0.0
        %1057 = vadd.xlane.f32.xlu0 %v1056
        %v1058 = vpop.xlane.xlu0 %1057
        %v1059 = vsel %vm1025, %v1049, 0.0
        %1060 = vadd.xlane.f32.xlu0 %v1059
        %v1061 = vpop.xlane.xlu0 %1060
        %v1062 = vrcp.pop %v1052
        %v1063 = vrcp.pop %v1055
        %v1064 = vrcp.pop %v1058
        %v1065 = vrcp.pop %v1061
        %v1066 = vmul.f32 %v1043, %v1062
        %v1067 = vmul.f32 %v1045, %v1063
        %v1068 = vmul.f32 %v1047, %v1064
        %v1069 = vmul.f32 %v1049, %v1065
        %v1070 = vpack.c.bf16 %v1066, %v1066
        %v1071 = vpack.c.bf16 %v1067, %v1067
        %v1072 = vpack.c.bf16 %v1068, %v1068
        %v1073 = vpack.c.bf16 %v1069, %v1069
        %1074 = vrot.lane.b32.xlu0 %v930, 64
        %v1075 = vpop.permute.xlu0 %1074
        %v1077 = vsel %vm1025, %v1070, 0
        %vm1079 = vcmask 1043456
        %v1081 = vsel %vm1079, %v1075, 0
        %1083 = vmatpush.bf16.msra.mxu0 0
        %1084 = vmatpush.bf16.msra.mxu0 0
        %1085 = vmatpush.bf16.msra.mxu0 0
        %1086 = vmatpush.bf16.msra.mxu0 0
        %1087 = vmatpush.bf16.msra.mxu0 0
        %1088 = vmatpush.bf16.msra.mxu0 0
        %1089 = vmatpush.bf16.msra.mxu0 0
        %1090 = vmatpush.bf16.msra.mxu0 %v1081
        %1091 = vmatmul.bf16.gmra.mxu0 %v1077
        %v1092 = vpop.f32.mrf.mxu0
        %v1093 = vadd.f32 0.0, %v1092
        %v1094 = vpop.f32.mrf.mxu0
        %1095 = vdwg.mxu0
        %1096 = vrot.lane.b32.xlu0 %v955, 64
        %v1097 = vpop.permute.xlu0 %1096
        %v1099 = vsel %vm1025, %v1071, 0
        %v1102 = vsel %vm1079, %v1097, 0
        %1104 = vmatpush.bf16.msra.mxu0 0
        %1105 = vmatpush.bf16.msra.mxu0 0
        %1106 = vmatpush.bf16.msra.mxu0 0
        %1107 = vmatpush.bf16.msra.mxu0 0
        %1108 = vmatpush.bf16.msra.mxu0 0
        %1109 = vmatpush.bf16.msra.mxu0 0
        %1110 = vmatpush.bf16.msra.mxu0 0
        %1111 = vmatpush.bf16.msra.mxu0 %v1102
        %1112 = vmatmul.bf16.gmra.mxu0 %v1099
        %v1113 = vpop.f32.mrf.mxu0
        %v1114 = vadd.f32 0.0, %v1113
        %v1115 = vpop.f32.mrf.mxu0
        %1116 = vdwg.mxu0
        %1117 = vrot.lane.b32.xlu0 %v979, 64
        %v1118 = vpop.permute.xlu0 %1117
        %v1120 = vsel %vm1025, %v1072, 0
        %v1123 = vsel %vm1079, %v1118, 0
        %1125 = vmatpush.bf16.msra.mxu0 0
        %1126 = vmatpush.bf16.msra.mxu0 0
        %1127 = vmatpush.bf16.msra.mxu0 0
        %1128 = vmatpush.bf16.msra.mxu0 0
        %1129 = vmatpush.bf16.msra.mxu0 0
        %1130 = vmatpush.bf16.msra.mxu0 0
        %1131 = vmatpush.bf16.msra.mxu0 0
        %1132 = vmatpush.bf16.msra.mxu0 %v1123
        %1133 = vmatmul.bf16.gmra.mxu0 %v1120
        %v1134 = vpop.f32.mrf.mxu0
        %v1135 = vadd.f32 0.0, %v1134
        %v1136 = vpop.f32.mrf.mxu0
        %1137 = vdwg.mxu0
        %1138 = vrot.lane.b32.xlu0 %v1003, 64
        %v1139 = vpop.permute.xlu0 %1138
        %v1141 = vsel %vm1025, %v1073, 0
        %v1144 = vsel %vm1079, %v1139, 0
        %1146 = vmatpush.bf16.msra.mxu0 0
        %1147 = vmatpush.bf16.msra.mxu0 0
        %1148 = vmatpush.bf16.msra.mxu0 0
        %1149 = vmatpush.bf16.msra.mxu0 0
        %1150 = vmatpush.bf16.msra.mxu0 0
        %1151 = vmatpush.bf16.msra.mxu0 0
        %1152 = vmatpush.bf16.msra.mxu0 0
        %1153 = vmatpush.bf16.msra.mxu0 %v1144
        %1154 = vmatmul.bf16.gmra.mxu0 %v1141
        %v1155 = vpop.f32.mrf.mxu0
        %v1156 = vadd.f32 0.0, %v1155
        %v1157 = vpop.f32.mrf.mxu0
        %1158 = vdwg.mxu0
        %v1159 = vpack.c.bf16 %v1114, %v1093
        %v1160 = vpack.c.bf16 %v1156, %v1135
        %v1161 = vld [vmem:[#allocation10] sm:$0xf]
        %v1162 = vld [vmem:[#allocation10 + $0x4] sm:$0xf]
        %1163 = vrot.lane.b32.xlu0 %v930, 112
        %v1164 = vpop.permute.xlu0 %1163
        %1165 = vrot.lane.b32.xlu0 %v930, 80
        %v1166 = vpop.permute.xlu0 %1165
        %v1168 = vsel %vm933, %v1164, 0
        %v1171 = vsel %vm933, %v1166, 0
        %1173 = vmatpush.bf16.xpose.msra.mxu0 0
        %1174 = vmatpush.bf16.xpose.msra.mxu0 0
        %1175 = vmatpush.bf16.xpose.msra.mxu0 0
        %1176 = vmatpush.bf16.xpose.msra.mxu0 0
        %1177 = vmatpush.bf16.xpose.msra.mxu0 0
        %1178 = vmatpush.bf16.xpose.msra.mxu0 0
        %1179 = vmatpush.bf16.xpose.msra.mxu0 0
        %1180 = vmatpush.bf16.xpose.msra.mxu0 %v1171
        %1181 = vmatmul.bf16.gmra.mxu0 %v1168
        %v1182 = vpop.f32.mrf.mxu0
        %v1183 = vadd.f32 0.0, %v1182
        %v1184 = vpop.f32.mrf.mxu0
        %1185 = vdwg.mxu0
        %1186 = vrot.lane.b32.xlu0 %v955, 112
        %v1187 = vpop.permute.xlu0 %1186
        %1188 = vrot.lane.b32.xlu0 %v955, 80
        %v1189 = vpop.permute.xlu0 %1188
        %v1191 = vsel %vm933, %v1187, 0
        %v1194 = vsel %vm933, %v1189, 0
        %1196 = vmatpush.bf16.xpose.msra.mxu0 0
        %1197 = vmatpush.bf16.xpose.msra.mxu0 0
        %1198 = vmatpush.bf16.xpose.msra.mxu0 0
        %1199 = vmatpush.bf16.xpose.msra.mxu0 0
        %1200 = vmatpush.bf16.xpose.msra.mxu0 0
        %1201 = vmatpush.bf16.xpose.msra.mxu0 0
        %1202 = vmatpush.bf16.xpose.msra.mxu0 0
        %1203 = vmatpush.bf16.xpose.msra.mxu0 %v1194
        %1204 = vmatmul.bf16.gmra.mxu0 %v1191
        %v1205 = vpop.f32.mrf.mxu0
        %v1206 = vadd.f32 0.0, %v1205
        %v1207 = vpop.f32.mrf.mxu0
        %1208 = vdwg.mxu0
        %1209 = vrot.lane.b32.xlu0 %v979, 112
        %v1210 = vpop.permute.xlu0 %1209
        %1211 = vrot.lane.b32.xlu0 %v979, 80
        %v1212 = vpop.permute.xlu0 %1211
        %v1214 = vsel %vm933, %v1210, 0
        %v1217 = vsel %vm933, %v1212, 0
        %1219 = vmatpush.bf16.xpose.msra.mxu0 0
        %1220 = vmatpush.bf16.xpose.msra.mxu0 0
        %1221 = vmatpush.bf16.xpose.msra.mxu0 0
        %1222 = vmatpush.bf16.xpose.msra.mxu0 0
        %1223 = vmatpush.bf16.xpose.msra.mxu0 0
        %1224 = vmatpush.bf16.xpose.msra.mxu0 0
        %1225 = vmatpush.bf16.xpose.msra.mxu0 0
        %1226 = vmatpush.bf16.xpose.msra.mxu0 %v1217
        %1227 = vmatmul.bf16.gmra.mxu0 %v1214
        %v1228 = vpop.f32.mrf.mxu0
        %v1229 = vadd.f32 0.0, %v1228
        %v1230 = vpop.f32.mrf.mxu0
        %1231 = vdwg.mxu0
        %1232 = vrot.lane.b32.xlu0 %v1003, 112
        %v1233 = vpop.permute.xlu0 %1232
        %1234 = vrot.lane.b32.xlu0 %v1003, 80
        %v1235 = vpop.permute.xlu0 %1234
        %v1237 = vsel %vm933, %v1233, 0
        %v1240 = vsel %vm933, %v1235, 0
        %1242 = vmatpush.bf16.xpose.msra.mxu0 0
        %1243 = vmatpush.bf16.xpose.msra.mxu0 0
        %1244 = vmatpush.bf16.xpose.msra.mxu0 0
        %1245 = vmatpush.bf16.xpose.msra.mxu0 0
        %1246 = vmatpush.bf16.xpose.msra.mxu0 0
        %1247 = vmatpush.bf16.xpose.msra.mxu0 0
        %1248 = vmatpush.bf16.xpose.msra.mxu0 0
        %1249 = vmatpush.bf16.xpose.msra.mxu0 %v1240
        %1250 = vmatmul.bf16.gmra.mxu0 %v1237
        %v1251 = vpop.f32.mrf.mxu0
        %v1252 = vadd.f32 0.0, %v1251
        %v1253 = vpop.f32.mrf.mxu0
        %1254 = vdwg.mxu0
        %v1255 = vsel %vm1025, %v1183, -inf
        %1256 = vmax.xlane.f32.xlu0 %v1255
        %v1257 = vpop.xlane.xlu0 %1256
        %v1258 = vsel %vm1025, %v1206, -inf
        %1259 = vmax.xlane.f32.xlu0 %v1258
        %v1260 = vpop.xlane.xlu0 %1259
        %v1261 = vsel %vm1025, %v1229, -inf
        %1262 = vmax.xlane.f32.xlu0 %v1261
        %v1263 = vpop.xlane.xlu0 %1262
        %v1264 = vsel %vm1025, %v1252, -inf
        %1265 = vmax.xlane.f32.xlu0 %v1264
        %v1266 = vpop.xlane.xlu0 %1265
        %v1267 = vsub.f32 %v1183, %v1257
        %v1268 = vsub.f32 %v1206, %v1260
        %v1269 = vsub.f32 %v1229, %v1263
        %v1270 = vsub.f32 %v1252, %v1266
        %v1271 = vmul.f32 %v1267, 1.442695
        %v1272 = vpow.pop %v1271
        %v1273 = vmul.f32 %v1268, 1.442695
        %v1274 = vpow.pop %v1273
        %v1275 = vmul.f32 %v1269, 1.442695
        %v1276 = vpow.pop %v1275
        %v1277 = vmul.f32 %v1270, 1.442695
        %v1278 = vpow.pop %v1277
        %v1279 = vsel %vm1025, %v1272, 0.0
        %1280 = vadd.xlane.f32.xlu0 %v1279
        %v1281 = vpop.xlane.xlu0 %1280
        %v1282 = vsel %vm1025, %v1274, 0.0
        %1283 = vadd.xlane.f32.xlu0 %v1282
        %v1284 = vpop.xlane.xlu0 %1283
        %v1285 = vsel %vm1025, %v1276, 0.0
        %1286 = vadd.xlane.f32.xlu0 %v1285
        %v1287 = vpop.xlane.xlu0 %1286
        %v1288 = vsel %vm1025, %v1278, 0.0
        %1289 = vadd.xlane.f32.xlu0 %v1288
        %v1290 = vpop.xlane.xlu0 %1289
        %v1291 = vrcp.pop %v1281
        %v1292 = vrcp.pop %v1284
        %v1293 = vrcp.pop %v1287
        %v1294 = vrcp.pop %v1290
        %v1295 = vmul.f32 %v1272, %v1291
        %v1296 = vmul.f32 %v1274, %v1292
        %v1297 = vmul.f32 %v1276, %v1293
        %v1298 = vmul.f32 %v1278, %v1294
        %v1299 = vpack.c.bf16 %v1295, %v1295
        %v1300 = vpack.c.bf16 %v1296, %v1296
        %v1301 = vpack.c.bf16 %v1297, %v1297
        %v1302 = vpack.c.bf16 %v1298, %v1298
        %1303 = vrot.lane.b32.xlu0 %v930, 48
        %v1304 = vpop.permute.xlu0 %1303
        %v1306 = vsel %vm1025, %v1299, 0
        %v1309 = vsel %vm1079, %v1304, 0
        %1311 = vmatpush.bf16.msra.mxu0 0
        %1312 = vmatpush.bf16.msra.mxu0 0
        %1313 = vmatpush.bf16.msra.mxu0 0
        %1314 = vmatpush.bf16.msra.mxu0 0
        %1315 = vmatpush.bf16.msra.mxu0 0
        %1316 = vmatpush.bf16.msra.mxu0 0
        %1317 = vmatpush.bf16.msra.mxu0 0
        %1318 = vmatpush.bf16.msra.mxu0 %v1309
        %1319 = vmatmul.bf16.gmra.mxu0 %v1306
        %v1320 = vpop.f32.mrf.mxu0
        %v1321 = vadd.f32 0.0, %v1320
        %v1322 = vpop.f32.mrf.mxu0
        %1323 = vdwg.mxu0
        %1324 = vrot.lane.b32.xlu0 %v955, 48
        %v1325 = vpop.permute.xlu0 %1324
        %v1327 = vsel %vm1025, %v1300, 0
        %v1330 = vsel %vm1079, %v1325, 0
        %1332 = vmatpush.bf16.msra.mxu0 0
        %1333 = vmatpush.bf16.msra.mxu0 0
        %1334 = vmatpush.bf16.msra.mxu0 0
        %1335 = vmatpush.bf16.msra.mxu0 0
        %1336 = vmatpush.bf16.msra.mxu0 0
        %1337 = vmatpush.bf16.msra.mxu0 0
        %1338 = vmatpush.bf16.msra.mxu0 0
        %1339 = vmatpush.bf16.msra.mxu0 %v1330
        %1340 = vmatmul.bf16.gmra.mxu0 %v1327
        %v1341 = vpop.f32.mrf.mxu0
        %v1342 = vadd.f32 0.0, %v1341
        %v1343 = vpop.f32.mrf.mxu0
        %1344 = vdwg.mxu0
        %1345 = vrot.lane.b32.xlu0 %v979, 48
        %v1346 = vpop.permute.xlu0 %1345
        %v1348 = vsel %vm1025, %v1301, 0
        %v1351 = vsel %vm1079, %v1346, 0
        %1353 = vmatpush.bf16.msra.mxu0 0
        %1354 = vmatpush.bf16.msra.mxu0 0
        %1355 = vmatpush.bf16.msra.mxu0 0
        %1356 = vmatpush.bf16.msra.mxu0 0
        %1357 = vmatpush.bf16.msra.mxu0 0
        %1358 = vmatpush.bf16.msra.mxu0 0
        %1359 = vmatpush.bf16.msra.mxu0 0
        %1360 = vmatpush.bf16.msra.mxu0 %v1351
        %1361 = vmatmul.bf16.gmra.mxu0 %v1348
        %v1362 = vpop.f32.mrf.mxu0
        %v1363 = vadd.f32 0.0, %v1362
        %v1364 = vpop.f32.mrf.mxu0
        %1365 = vdwg.mxu0
        %1366 = vrot.lane.b32.xlu0 %v1003, 48
        %v1367 = vpop.permute.xlu0 %1366
        %v1369 = vsel %vm1025, %v1302, 0
        %v1372 = vsel %vm1079, %v1367, 0
        %1374 = vmatpush.bf16.msra.mxu0 0
        %1375 = vmatpush.bf16.msra.mxu0 0
        %1376 = vmatpush.bf16.msra.mxu0 0
        %1377 = vmatpush.bf16.msra.mxu0 0
        %1378 = vmatpush.bf16.msra.mxu0 0
        %1379 = vmatpush.bf16.msra.mxu0 0
        %1380 = vmatpush.bf16.msra.mxu0 0
        %1381 = vmatpush.bf16.msra.mxu0 %v1372
        %1382 = vmatmul.bf16.gmra.mxu0 %v1369
        %v1383 = vpop.f32.mrf.mxu0
        %v1384 = vadd.f32 0.0, %v1383
        %v1385 = vpop.f32.mrf.mxu0
        %1386 = vdwg.mxu0
        %v1387 = vpack.c.bf16 %v1342, %v1321
        %v1388 = vpack.c.bf16 %v1384, %v1363
        %v1389 = vld [vmem:[#allocation10 + $0x8] sm:$0xf]
        %v1390 = vld [vmem:[#allocation10 + $0xc] sm:$0xf]
        %v1393 = vunpack.c.l.b16 %v1389
        %v1394 = vunpack.c.l.b16 %v1390
        %v1395 = vpack.c.b16 %v1394, %v1393
        %v1398 = vsel %vm933, %v1387, 0
        %v1401 = vsel %vm933, %v1388, 0
        %1403 = vmatpush.bf16.msra.mxu0 0
        %1404 = vmatpush.bf16.msra.mxu0 0
        %1405 = vmatpush.bf16.msra.mxu0 0
        %1406 = vmatpush.bf16.msra.mxu0 0
        %1407 = vmatpush.bf16.msra.mxu0 0
        %1408 = vmatpush.bf16.msra.mxu0 0
        %1409 = vmatpush.bf16.msra.mxu0 0
        %1410 = vmatpush.bf16.msra.mxu0 %v1395
        %1411 = vmatmul.bf16.gmra.mxu0 %v1398
        %v1412 = vpop.f32.mrf.mxu0
        %v1413 = vadd.f32 0.0, %v1412
        %v1414 = vpop.f32.mrf.mxu0
        %v1415 = vadd.f32 0.0, %v1414
        %1416 = vmatmul.bf16.gmra.mxu0 %v1401
        %v1417 = vpop.f32.mrf.mxu0
        %v1418 = vadd.f32 0.0, %v1417
        %v1419 = vpop.f32.mrf.mxu0
        %v1420 = vadd.f32 0.0, %v1419
        %1421 = vdwg.mxu0
        %v1424 = vunpack.c.l.b16 %v1161
        %v1425 = vunpack.c.l.b16 %v1162
        %v1426 = vpack.c.b16 %v1425, %v1424
        %v1429 = vsel %vm933, %v1159, 0
        %v1432 = vsel %vm933, %v1160, 0
        %1434 = vmatpush.bf16.msra.mxu0 0
        %1435 = vmatpush.bf16.msra.mxu0 0
        %1436 = vmatpush.bf16.msra.mxu0 0
        %1437 = vmatpush.bf16.msra.mxu0 0
        %1438 = vmatpush.bf16.msra.mxu0 0
        %1439 = vmatpush.bf16.msra.mxu0 0
        %1440 = vmatpush.bf16.msra.mxu0 0
        %1441 = vmatpush.bf16.msra.mxu0 %v1426
        %1442 = vmatmul.bf16.gmra.mxu0 %v1429
        %v1443 = vpop.f32.mrf.mxu0
        %v1444 = vadd.f32 %v1413, %v1443
        %v1445 = vpop.f32.mrf.mxu0
        %v1446 = vadd.f32 %v1415, %v1445
        %1447 = vmatmul.bf16.gmra.mxu0 %v1432
        %v1448 = vpop.f32.mrf.mxu0
        %v1449 = vadd.f32 %v1418, %v1448
        %v1450 = vpop.f32.mrf.mxu0
        %v1451 = vadd.f32 %v1420, %v1450
        %1452 = vdwg.mxu0
        %v1453 = vperm.slane %v520, 0
        %v1454 = vadd.f32 %v1444, %v1453
        %v1455 = vadd.f32 %v1446, %v1453
        %v1456 = vadd.f32 %v1449, %v1453
        %v1457 = vadd.f32 %v1451, %v1453
        %v1458 = vadd.f32 %v1454, %v514
        %v1459 = vadd.f32 %v1455, %v515
        %v1460 = vadd.f32 %v1456, %v516
        %v1461 = vadd.f32 %v1457, %v517
        %v1462 = vsel %vm571, %v1458, 0.0
        %1463 = vadd.xlane.f32.xlu0 %v1462
        %v1464 = vpop.xlane.xlu0 %1463
        %v1465 = vsel %vm571, %v1459, 0.0
        %1466 = vadd.xlane.f32.xlu0 %v1465
        %v1467 = vpop.xlane.xlu0 %1466
        %v1468 = vsel %vm571, %v1460, 0.0
        %1469 = vadd.xlane.f32.xlu0 %v1468
        %v1470 = vpop.xlane.xlu0 %1469
        %v1471 = vsel %vm571, %v1461, 0.0
        %1472 = vadd.xlane.f32.xlu0 %v1471
        %v1473 = vpop.xlane.xlu0 %1472
        %v1474 = vrcp.pop 32.0
        %v1475 = vmul.f32 32.0, %v1474
        %v1476 = vsub.f32 1.0, %v1475
        %v1477 = vmul.f32 %v1474, %v1476
        %v1478 = vadd.f32 %v1474, %v1477
        %vm1479 = vweird.f32 %v1474
        %v1480 = vsel %vm1479, %v1474, %v1478
        %v1481 = vmul.f32 %v1464, %v1480
        %v1482 = vmul.f32 %v1467, %v1480
        %v1483 = vmul.f32 %v1470, %v1480
        %v1484 = vmul.f32 %v1473, %v1480
        %v1485 = vsub.f32 %v1458, %v1481
        %v1486 = vsub.f32 %v1459, %v1482
        %v1487 = vsub.f32 %v1460, %v1483
        %v1488 = vsub.f32 %v1461, %v1484
        %v1489 = vmul.f32 %v1485, %v1485
        %v1490 = vmul.f32 %v1486, %v1486
        %v1491 = vmul.f32 %v1487, %v1487
        %v1492 = vmul.f32 %v1488, %v1488
        %v1493 = vsel %vm571, %v1489, 0.0
        %1494 = vadd.xlane.f32.xlu0 %v1493
        %v1495 = vpop.xlane.xlu0 %1494
        %v1496 = vsel %vm571, %v1490, 0.0
        %1497 = vadd.xlane.f32.xlu0 %v1496
        %v1498 = vpop.xlane.xlu0 %1497
        %v1499 = vsel %vm571, %v1491, 0.0
        %1500 = vadd.xlane.f32.xlu0 %v1499
        %v1501 = vpop.xlane.xlu0 %1500
        %v1502 = vsel %vm571, %v1492, 0.0
        %1503 = vadd.xlane.f32.xlu0 %v1502
        %v1504 = vpop.xlane.xlu0 %1503
        %v1505 = vmul.f32 %v1495, %v1480
        %v1506 = vmul.f32 %v1498, %v1480
        %v1507 = vmul.f32 %v1501, %v1480
        %v1508 = vmul.f32 %v1504, %v1480
        %v1509 = vadd.f32 %v1505, 1e-05
        %v1510 = vadd.f32 %v1506, 1e-05
        %v1511 = vadd.f32 %v1507, 1e-05
        %v1512 = vadd.f32 %v1508, 1e-05
        %v1513 = vrsqrt.pop %v1509
        %v1514 = vmul.f32 %v1513, %v1509
        %v1515 = vmul.f32 %v1514, %v1513
        %v1516 = vmul.f32 0.5, %v1515
        %v1517 = vsub.f32 1.5, %v1516
        %v1518 = vmul.f32 %v1513, %v1517
        %vm1519 = vweird.f32 %v1509
        %vm1520 = vweird.f32 %v1513
        %vm1521 = vmor %vm1519, %vm1520
        %v1522 = vsel %vm1521, %v1513, %v1518
        %v1523 = vrsqrt.pop %v1510
        %v1524 = vmul.f32 %v1523, %v1510
        %v1525 = vmul.f32 %v1524, %v1523
        %v1526 = vmul.f32 0.5, %v1525
        %v1527 = vsub.f32 1.5, %v1526
        %v1528 = vmul.f32 %v1523, %v1527
        %vm1529 = vweird.f32 %v1510
        %vm1530 = vweird.f32 %v1523
        %vm1531 = vmor %vm1529, %vm1530
        %v1532 = vsel %vm1531, %v1523, %v1528
        %v1533 = vrsqrt.pop %v1511
        %v1534 = vmul.f32 %v1533, %v1511
        %v1535 = vmul.f32 %v1534, %v1533
        %v1536 = vmul.f32 0.5, %v1535
        %v1537 = vsub.f32 1.5, %v1536
        %v1538 = vmul.f32 %v1533, %v1537
        %vm1539 = vweird.f32 %v1511
        %vm1540 = vweird.f32 %v1533
        %vm1541 = vmor %vm1539, %vm1540
        %v1542 = vsel %vm1541, %v1533, %v1538
        %v1543 = vrsqrt.pop %v1512
        %v1544 = vmul.f32 %v1543, %v1512
        %v1545 = vmul.f32 %v1544, %v1543
        %v1546 = vmul.f32 0.5, %v1545
        %v1547 = vsub.f32 1.5, %v1546
        %v1548 = vmul.f32 %v1543, %v1547
        %vm1549 = vweird.f32 %v1512
        %vm1550 = vweird.f32 %v1543
        %vm1551 = vmor %vm1549, %vm1550
        %v1552 = vsel %vm1551, %v1543, %v1548
        %v1553 = vmul.f32 %v1485, %v1522
        %v1554 = vmul.f32 %v1486, %v1532
        %v1555 = vmul.f32 %v1487, %v1542
        %v1556 = vmul.f32 %v1488, %v1552
        %v1557 = vperm.slane %v521, 0
        %v1558 = vmul.f32 %v1553, %v1557
        %v1559 = vmul.f32 %v1554, %v1557
        %v1560 = vmul.f32 %v1555, %v1557
        %v1561 = vmul.f32 %v1556, %v1557
        %v1562 = vperm.slane %v522, 0
        %v1563 = vadd.f32 %v1558, %v1562
        %v1564 = vadd.f32 %v1559, %v1562
        %v1565 = vadd.f32 %v1560, %v1562
        %v1566 = vadd.f32 %v1561, %v1562
        %v1567 = vpack.c.bf16 %v1564, %v1563
        %v1568 = vpack.c.bf16 %v1566, %v1565
        %v1569 = vld [vmem:[#allocation11] sm:$0xf]
        %v1570 = vld [vmem:[#allocation11 + $0x4] sm:$0xf]
        %v1571 = vld [vmem:[#allocation11 + $0x8] sm:$0xf]
        %v1572 = vld [vmem:[#allocation11 + $0xc] sm:$0xf]
        %v1573 = vld [vmem:[%s10] sm:$0x1]
        %v1575 = vperm.slane %v1573, 0
        %v1581 = vunpack.c.l.b16 %v1569
        %v1582 = vunpack.c.l.b16 %v1570
        %v1583 = vunpack.c.l.b16 %v1571
        %v1584 = vunpack.c.l.b16 %v1572
        %v1585 = vpack.c.b16 %v1582, %v1581
        %v1586 = vpack.c.b16 %v1584, %v1583
        %v1590 = vsel %vm571, %v1567, 0
        %v1593 = vsel %vm571, %v1568, 0
        %1595 = vmatpush.bf16.msra.mxu0 0
        %1596 = vmatpush.bf16.msra.mxu0 0
        %1597 = vmatpush.bf16.msra.mxu0 0
        %1598 = vmatpush.bf16.msra.mxu0 0
        %1599 = vmatpush.bf16.msra.mxu0 0
        %1600 = vmatpush.bf16.msra.mxu0 0
        %1601 = vmatpush.bf16.msra.mxu0 %v1586
        %1602 = vmatpush.bf16.msra.mxu0 %v1585
        %1603 = vmatmul.bf16.gmra.mxu0 %v1590
        %v1604 = vpop.f32.mrf.mxu0
        %v1605 = vadd.f32 %v1575, %v1604
        %v1606 = vpop.f32.mrf.mxu0
        %v1607 = vadd.f32 %v1575, %v1606
        %1608 = vmatmul.bf16.gmra.mxu0 %v1593
        %v1609 = vpop.f32.mrf.mxu0
        %v1610 = vadd.f32 %v1575, %v1609
        %v1611 = vpop.f32.mrf.mxu0
        %v1612 = vadd.f32 %v1575, %v1611
        %1613 = vdwg.mxu0
        %v1614 = vmax.f32 %v1605, 0.0
        %v1615 = vmax.f32 %v1607, 0.0
        %v1616 = vmax.f32 %v1610, 0.0
        %v1617 = vmax.f32 %v1612, 0.0
        %v1618 = vpack.c.bf16 %v1615, %v1614
        %v1619 = vpack.c.bf16 %v1617, %v1616
        %v1620 = vld [vmem:[%s8] sm:$0xf]
        %v1621 = vld [vmem:[%s8 + $0x4] sm:$0xf]
        %v1622 = vld [vmem:[%s8 + $0x8] sm:$0xf]
        %v1623 = vld [vmem:[%s8 + $0xc] sm:$0xf]
        %v1624 = vld [vmem:[%s8 + $0x10] sm:$0xf]
        %v1625 = vld [vmem:[%s8 + $0x14] sm:$0xf]
        %v1626 = vld [vmem:[%s8 + $0x18] sm:$0xf]
        %v1627 = vld [vmem:[%s8 + $0x1c] sm:$0xf]
        %v1628 = vperm.slane %v523, 0
        %v1637 = vunpack.c.l.b16 %v1620
        %v1638 = vunpack.c.l.b16 %v1621
        %v1639 = vunpack.c.l.b16 %v1622
        %v1640 = vunpack.c.l.b16 %v1623
        %v1641 = vunpack.c.l.b16 %v1624
        %v1642 = vunpack.c.l.b16 %v1625
        %v1643 = vunpack.c.l.b16 %v1626
        %v1644 = vunpack.c.l.b16 %v1627
        %v1645 = vpack.c.b16 %v1638, %v1637
        %v1646 = vpack.c.b16 %v1640, %v1639
        %v1647 = vpack.c.b16 %v1642, %v1641
        %v1648 = vpack.c.b16 %v1644, %v1643
        %v1654 = vsel %vm871, %v1618, 0
        %v1657 = vsel %vm871, %v1619, 0
        %1659 = vmatpush.bf16.msra.mxu0 0
        %1660 = vmatpush.bf16.msra.mxu0 0
        %1661 = vmatpush.bf16.msra.mxu0 0
        %1662 = vmatpush.bf16.msra.mxu0 0
        %1663 = vmatpush.bf16.msra.mxu0 %v1648
        %1664 = vmatpush.bf16.msra.mxu0 %v1647
        %1665 = vmatpush.bf16.msra.mxu0 %v1646
        %1666 = vmatpush.bf16.msra.mxu0 %v1645
        %1667 = vmatmul.bf16.gmra.mxu0 %v1654
        %v1668 = vpop.f32.mrf.mxu0
        %v1669 = vadd.f32 %v1628, %v1668
        %v1670 = vpop.f32.mrf.mxu0
        %v1671 = vadd.f32 %v1628, %v1670
        %1672 = vmatmul.bf16.gmra.mxu0 %v1657
        %v1673 = vpop.f32.mrf.mxu0
        %v1674 = vadd.f32 %v1628, %v1673
        %v1675 = vpop.f32.mrf.mxu0
        %v1676 = vadd.f32 %v1628, %v1675
        %1677 = vdwg.mxu0
        %v1678 = vadd.f32 %v1669, %v1563
        %v1679 = vadd.f32 %v1671, %v1564
        %v1680 = vadd.f32 %v1674, %v1565
        %v1681 = vadd.f32 %v1676, %v1566
        %v1682 = vsel %vm571, %v1678, 0.0
        %1683 = vadd.xlane.f32.xlu0 %v1682
        %v1684 = vpop.xlane.xlu0 %1683
        %v1685 = vsel %vm571, %v1679, 0.0
        %1686 = vadd.xlane.f32.xlu0 %v1685
        %v1687 = vpop.xlane.xlu0 %1686
        %v1688 = vsel %vm571, %v1680, 0.0
        %1689 = vadd.xlane.f32.xlu0 %v1688
        %v1690 = vpop.xlane.xlu0 %1689
        %v1691 = vsel %vm571, %v1681, 0.0
        %1692 = vadd.xlane.f32.xlu0 %v1691
        %v1693 = vpop.xlane.xlu0 %1692
        %v1694 = vmul.f32 %v1684, %v1480
        %v1695 = vmul.f32 %v1687, %v1480
        %v1696 = vmul.f32 %v1690, %v1480
        %v1697 = vmul.f32 %v1693, %v1480
        %v1698 = vsub.f32 %v1678, %v1694
        %v1699 = vsub.f32 %v1679, %v1695
        %v1700 = vsub.f32 %v1680, %v1696
        %v1701 = vsub.f32 %v1681, %v1697
        %v1702 = vmul.f32 %v1698, %v1698
        %v1703 = vmul.f32 %v1699, %v1699
        %v1704 = vmul.f32 %v1700, %v1700
        %v1705 = vmul.f32 %v1701, %v1701
        %v1706 = vsel %vm571, %v1702, 0.0
        %1707 = vadd.xlane.f32.xlu0 %v1706
        %v1708 = vpop.xlane.xlu0 %1707
        %v1709 = vsel %vm571, %v1703, 0.0
        %1710 = vadd.xlane.f32.xlu0 %v1709
        %v1711 = vpop.xlane.xlu0 %1710
        %v1712 = vsel %vm571, %v1704, 0.0
        %1713 = vadd.xlane.f32.xlu0 %v1712
        %v1714 = vpop.xlane.xlu0 %1713
        %v1715 = vsel %vm571, %v1705, 0.0
        %1716 = vadd.xlane.f32.xlu0 %v1715
        %v1717 = vpop.xlane.xlu0 %1716
        %v1718 = vmul.f32 %v1708, %v1480
        %v1719 = vmul.f32 %v1711, %v1480
        %v1720 = vmul.f32 %v1714, %v1480
        %v1721 = vmul.f32 %v1717, %v1480
        %v1722 = vadd.f32 %v1718, 1e-05
        %v1723 = vadd.f32 %v1719, 1e-05
        %v1724 = vadd.f32 %v1720, 1e-05
        %v1725 = vadd.f32 %v1721, 1e-05
        %v1726 = vrsqrt.pop %v1722
        %v1727 = vmul.f32 %v1726, %v1722
        %v1728 = vmul.f32 %v1727, %v1726
        %v1729 = vmul.f32 0.5, %v1728
        %v1730 = vsub.f32 1.5, %v1729
        %v1731 = vmul.f32 %v1726, %v1730
        %vm1732 = vweird.f32 %v1722
        %vm1733 = vweird.f32 %v1726
        %vm1734 = vmor %vm1732, %vm1733
        %v1735 = vsel %vm1734, %v1726, %v1731
        %v1736 = vrsqrt.pop %v1723
        %v1737 = vmul.f32 %v1736, %v1723
        %v1738 = vmul.f32 %v1737, %v1736
        %v1739 = vmul.f32 0.5, %v1738
        %v1740 = vsub.f32 1.5, %v1739
        %v1741 = vmul.f32 %v1736, %v1740
        %vm1742 = vweird.f32 %v1723
        %vm1743 = vweird.f32 %v1736
        %vm1744 = vmor %vm1742, %vm1743
        %v1745 = vsel %vm1744, %v1736, %v1741
        %v1746 = vrsqrt.pop %v1724
        %v1747 = vmul.f32 %v1746, %v1724
        %v1748 = vmul.f32 %v1747, %v1746
        %v1749 = vmul.f32 0.5, %v1748
        %v1750 = vsub.f32 1.5, %v1749
        %v1751 = vmul.f32 %v1746, %v1750
        %vm1752 = vweird.f32 %v1724
        %vm1753 = vweird.f32 %v1746
        %vm1754 = vmor %vm1752, %vm1753
        %v1755 = vsel %vm1754, %v1746, %v1751
        %v1756 = vrsqrt.pop %v1725
        %v1757 = vmul.f32 %v1756, %v1725
        %v1758 = vmul.f32 %v1757, %v1756
        %v1759 = vmul.f32 0.5, %v1758
        %v1760 = vsub.f32 1.5, %v1759
        %v1761 = vmul.f32 %v1756, %v1760
        %vm1762 = vweird.f32 %v1725
        %vm1763 = vweird.f32 %v1756
        %vm1764 = vmor %vm1762, %vm1763
        %v1765 = vsel %vm1764, %v1756, %v1761
        %v1766 = vmul.f32 %v1698, %v1735
        %v1767 = vmul.f32 %v1699, %v1745
        %v1768 = vmul.f32 %v1700, %v1755
        %v1769 = vmul.f32 %v1701, %v1765
        %v1770 = vperm.slane %v524, 0
        %v1771 = vmul.f32 %v1766, %v1770
        %v1772 = vmul.f32 %v1767, %v1770
        %v1773 = vmul.f32 %v1768, %v1770
        %v1774 = vmul.f32 %v1769, %v1770
        %v1775 = vperm.slane %v525, 0
        %v1776 = vadd.f32 %v1771, %v1775
        %v1777 = vadd.f32 %v1772, %v1775
        %v1778 = vadd.f32 %v1773, %v1775
        %v1779 = vadd.f32 %v1774, %v1775
        %1780 = vst.msk [vmem:[%s509] sm:$0xff] %vm571, %v1776
        %1781 = vst.msk [vmem:[%s509 + $0x8] sm:$0xff] %vm571, %v1777
        %1782 = vst.msk [vmem:[%s509 + $0x10] sm:$0xff] %vm571, %v1778
        %1783 = vst.msk [vmem:[%s509 + $0x18] sm:$0xff] %vm571, %v1779
        %s1784 = sand.u32 %s282, 1
        %s1785 = scalar_lea.sflag [#allocation4], %s1784
        %s1786 = sand.u32 %s282, 1
        %s1787 = smul.addr %s1786, 32
        %s1788 = scalar_lea.vmem [#allocation13], %s1787
        // Predicated region
        $region89: #{tpu_custom_call.1} parent=63 // pred_check
          %p1789 = pneg %p292
        $region90: #{tpu_custom_call.1} parent=63 // pred_check_branch
          %1791 = sbr.rel (%p1789) target = $region92
        $region91: #{tpu_custom_call.1} parent=63 // pred_region
          %s1792 = smul.u32 4, %s33
          %1794 = vsyncadd %s1785, 0
          %s1795 = smul.addr %s1792, 8
          %s1796 = scalar_lea.hbm %s11, %s1795
          %s1797 = sshll.u32 %s1788, 4
          %s1798 = int_to_ptr.vmem [resolvable:$true] %s1797
          %s1799 = sshll.u32 %s1796, 4
          %s1800 = int_to_ptr.hbm [resolvable:$true] %s1799
          %1805 = dma.vmem_to_hbm [thread:$0]  %s1798, 512, %s1800, %s1785, 128, 128, 8
        $region92: #{tpu_custom_call.1} parent=63 // pred_fallthru
          _
      $region64: #{tpu_custom_call.1} parent=5 // pred_fallthru
        _
      %p1806 = scmp.le.s32.totalorder 2, %s28
      // Predicated region
      $region93: #{tpu_custom_call.1} parent=5 // pred_check
        %p1807 = pneg %p1806
      $region94: #{tpu_custom_call.1} parent=5 // pred_check_branch
        %1809 = sbr.rel (%p1807) target = $region96
      $region95: #{tpu_custom_call.1} parent=5 // pred_region
        %s1810 = ssub.s32 %s28, 2
        // Predicated region
        $region97: #{tpu_custom_call.1} parent=95 // pred_check
          %p1811 = pneg %p298
        $region98: #{tpu_custom_call.1} parent=95 // pred_check_branch
          %1813 = sbr.rel (%p1811) target = $region100
        $region99: #{tpu_custom_call.1} parent=95 // pred_region
          %s1814 = sand.u32 %s283, 1
          %s1815 = scalar_lea.sflag [#allocation4], %s1814
          %s1816 = sand.u32 %s283, 1
          %s1817 = smul.addr %s1816, 32
          %s1818 = scalar_lea.vmem [#allocation13], %s1817
          %1820 = dma.done %s1815, 512
        $region100: #{tpu_custom_call.1} parent=95 // pred_fallthru
          _
      $region96: #{tpu_custom_call.1} parent=5 // pred_fallthru
        _
    $region6: #{tpu_custom_call.1} parent=1 // loop_footer
      %s32 = sadd.s32 1, %s28
    $region7: #{tpu_custom_call.1} parent=1 // loop_footer_branch
      %27 = sbr.rel target = $region3
    $region8: #{tpu_custom_call.1} parent=1 // loop_exit
      _
    %1821 = vsyncpa [#allocation3], 1
    %s1822 = scalar_lea.sflag [#allocation3], 1
    %1823 = vsyncpa %s1822, 1
    %1824 = vsyncpa [#allocation6], 1
    %s1825 = scalar_lea.sflag [#allocation6], 1
    %1826 = vsyncpa %s1825, 1
    %1827 = vsyncpa [#allocation9], 1
    %1828 = vsyncpa [#allocation12], 1
    %1829 = vsyncpa [#allocation4], 1
    %s1830 = scalar_lea.sflag [#allocation4], 1
    %1831 = vsyncpa %s1830, 1

</llo_original>
